<compile_context>
chip_gen: v5e
topology: v5e:2x2
jax: 0.10.0
libtpu: 0.0.40
codegen_flags: <defaults>
</compile_context>

<pallas_src>
import jax
import jax.numpy as jnp
from jax import lax
from jax.experimental import pallas as pl
from jax.experimental.pallas import tpu as pltpu

BN_EPS = 1e-5
LEAKY_SLOPE = 0.1
MIN_WIDTH = 0.1
_CHUNK = 2048  # inner lane-chunk: intermediates ~ (64+32)*_CHUNK*4 B ~= 0.8 MiB


def _round_up(n, m):
    return ((n + m - 1) // m) * m


def _mlp_kernel(x_ref, w1b_ref, w2_ref, b2_ref, w3_ref, b3_ref, o_ref):
    """One batch tile. Feature-major: batch on the lane axis.

    x_ref:  [2, TB]   row 0 = x, row 1 = ones (bias column for layer 1)
    w1b:    [64, 2]   BN-folded [w1' | b1']
    w2:     [32, 64]  BN-folded
    b2:     [32, 1]
    w3:     [1, 32]
    b3:     [1, 1]
    o_ref:  [1, TB]
    """
    # Weights are tiny: load once per grid step, hoist bias broadcasts above
    # the chunk loop so no per-chunk cross-lane (XLU) broadcast is emitted.
    w1b = w1b_ref[...]                                     # [64, 2]
    w2 = w2_ref[...]                                       # [32, 64]
    w3 = w3_ref[...]                                       # [1, 32]
    b2 = jnp.broadcast_to(b2_ref[...], (w2.shape[0], _CHUNK))   # [32, CHUNK]
    b3 = jnp.broadcast_to(b3_ref[...], (w3.shape[0], _CHUNK))   # [1, CHUNK]

    tb = x_ref.shape[1]
    n_chunks = tb // _CHUNK                                # static

    def chunk_body(c, carry):
        off = pl.multiple_of(c * _CHUNK, _CHUNK)
        xa = x_ref[:, pl.ds(off, _CHUNK)]                  # [2, CHUNK]

        # ---- Layer 1: Linear(1 -> 64) + folded BN, on the MXU (K=2) ------
        h = jnp.dot(w1b, xa, preferred_element_type=jnp.float32)   # [64, CHUNK]
        h = jnp.maximum(h, LEAKY_SLOPE * h)                # LeakyReLU(0.1)
        # Dropout(0.2): identity at inference.

        # ---- Layer 2: Linear(64 -> 32) + folded BN (MXU, batch on N) -----
        h = jnp.dot(w2, h, preferred_element_type=jnp.float32) + b2
        h = jnp.maximum(h, LEAKY_SLOPE * h)                # [32, CHUNK]

        # ---- Head: Linear(32 -> 1) + Softplus(beta=1) + clamp(min=0.1) ---
        w = jnp.dot(w3, h, preferred_element_type=jnp.float32) + b3   # [1, CHUNK]
        # Numerically stable softplus: max(w,0) + log(1 + exp(-|w|)).
        w = jnp.maximum(w, 0.0) + jnp.log(1.0 + jnp.exp(-jnp.abs(w)))
        o_ref[:, pl.ds(off, _CHUNK)] = jnp.maximum(w, MIN_WIDTH)
        return carry

    lax.fori_loop(0, n_chunks, chunk_body, 0)


def regression_scoring_mlp_forward(x, params, block_batch=32768):
    """x: [B, 1] float32 absolute errors. Returns width: [B, 1] float32."""
    B = x.shape[0]
    block_batch = max(int(block_batch), _CHUNK)

    (w1, b1, g1, bt1, rm1, rv1,
     w2, b2, g2, bt2, rm2, rv2,
     w3, b3) = params

    # Fold eval-mode BatchNorm (running stats) into the preceding Linear and
    # transpose everything to the feature-major kernel layout.
    s1 = g1 * lax.rsqrt(rv1 + BN_EPS)                      # [1, 64]
    w1_fm = (w1 * s1).T                                    # [64, 1]
    b1_fm = ((b1 - rm1) * s1 + bt1).T                      # [64, 1]
    w1b_fm = jnp.concatenate([w1_fm, b1_fm], axis=1)       # [64, 2]  (MXU layer 1)
    s2 = g2 * lax.rsqrt(rv2 + BN_EPS)                      # [1, 32]
    w2_fm = (w2 * s2).T                                    # [32, 64]
    b2_fm = ((b2 - rm2) * s2 + bt2).T                      # [32, 1]
    w3_fm = w3.T                                           # [1, 32]
    b3_fm = b3                                             # [1, 1]

    # ---- Tile selection ---------------------------------------------------
    # Large tiles amortize the ~0.35 us/step pipeline overhead; the inner
    # chunk loop bounds VMEM regardless of TB (v7x-safe). Keep >= 2 tiles when
    # there is enough work so v7x's two TensorCores both run, and pick TB from
    # an even split of B so padding waste stays small.
    n_tiles = max(1, pl.cdiv(B, block_batch))
    if n_tiles == 1 and B > 2 * _CHUNK:
        n_tiles = 2
    TB = _round_up(pl.cdiv(B, n_tiles), _CHUNK)
    n_tiles = pl.cdiv(B, TB)
    B_pad = n_tiles * TB

    x_fm = x.astype(jnp.float32).reshape(1, B)             # batch on lanes
    if B_pad != B:
        x_fm = jnp.pad(x_fm, ((0, 0), (0, B_pad - B)))
    # Augment with a ones row so layer 1's bias rides the MXU matmul.
    x_aug = jnp.concatenate([x_fm, jnp.ones_like(x_fm)], axis=0)   # [2, B_pad]

    const_map = lambda i: (0, 0)                           # weights: VMEM-resident
    weight_specs = [
        pl.BlockSpec(w1b_fm.shape, const_map),
        pl.BlockSpec(w2_fm.shape, const_map),
        pl.BlockSpec(b2_fm.shape, const_map),
        pl.BlockSpec(w3_fm.shape, const_map),
        pl.BlockSpec(b3_fm.shape, const_map),
    ]

    out_fm = pl.pallas_call(
        _mlp_kernel,
        out_shape=jax.ShapeDtypeStruct((1, B_pad), jnp.float32),
        grid=(n_tiles,),
        in_specs=[pl.BlockSpec((2, TB), lambda i: (0, i))] + weight_specs,
        out_specs=pl.BlockSpec((1, TB), lambda i: (0, i)),
        compiler_params=pltpu.CompilerParams(
            dimension_semantics=("parallel",),              # v7x: shard over 2 TCs
            vmem_limit_bytes=48 * 1024 * 1024,
        ),
    )(x_aug, w1b_fm, w2_fm, b2_fm, w3_fm, b3_fm)

    return out_fm[0, :B].reshape(B, 1)


def init_params(key, input_dim=1, hidden_dims=(64, 32), output_dim=1):
    """Deterministic init matching the PyTorch module:
       Linear weights: xavier_normal_  (std = sqrt(2 / (fan_in + fan_out)))
       Linear biases:  0.1
       BatchNorm1d:    gamma=1, beta=0, running_mean=0, running_var=1
    """
    dims = [input_dim] + list(hidden_dims) + [output_dim]
    keys = jax.random.split(key, len(dims) - 1)
    params = []
    for i in range(len(hidden_dims)):
        fan_in, fan_out = dims[i], dims[i + 1]
        std = (2.0 / (fan_in + fan_out)) ** 0.5
        w = std * jax.random.normal(keys[i], (fan_in, fan_out), dtype=jnp.float32)
        b = jnp.full((1, fan_out), 0.1, dtype=jnp.float32)
        gamma = jnp.ones((1, fan_out), dtype=jnp.float32)
        beta = jnp.zeros((1, fan_out), dtype=jnp.float32)
        rmean = jnp.zeros((1, fan_out), dtype=jnp.float32)
        rvar = jnp.ones((1, fan_out), dtype=jnp.float32)
        params += [w, b, gamma, beta, rmean, rvar]
    fan_in, fan_out = dims[-2], dims[-1]
    std = (2.0 / (fan_in + fan_out)) ** 0.5
    w = std * jax.random.normal(keys[-1], (fan_in, fan_out), dtype=jnp.float32)
    b = jnp.full((1, fan_out), 0.1, dtype=jnp.float32)
    params += [w, b]
    return tuple(params)


def l2_regularization(params, l2_lambda=1e-5):
    # Side attribute self.l2_reg in the PyTorch forward (does not affect output).
    # BN running stats are buffers (not parameters) in PyTorch -> excluded.
    w1, b1, g1, bt1, _, _, w2, b2, g2, bt2, _, _, w3, b3 = params
    param_tensors = [w1, b1, g1, bt1, w2, b2, g2, bt2, w3, b3]
    return l2_lambda * sum(jnp.sum(p ** 2) for p in param_tensors)


def _reference_forward(x, params):
    """Pure-JAX reference (unfolded BN, eval mode) for correctness check."""
    (w1, b1, g1, bt1, rm1, rv1,
     w2, b2, g2, bt2, rm2, rv2,
     w3, b3) = params
    h = x @ w1 + b1
    h = (h - rm1) * lax.rsqrt(rv1 + BN_EPS) * g1 + bt1
    h = jnp.where(h > 0, h, LEAKY_SLOPE * h)
    h = h @ w2 + b2
    h = (h - rm2) * lax.rsqrt(rv2 + BN_EPS) * g2 + bt2
    h = jnp.where(h > 0, h, LEAKY_SLOPE * h)
    w = h @ w3 + b3
    w = jnp.maximum(w, 0.0) + jnp.log1p(jnp.exp(-jnp.abs(w)))
    return jnp.maximum(w, MIN_WIDTH)


if __name__ == "__main__":
    key = jax.random.PRNGKey(0)
    pkey, xkey = jax.random.split(key)

    params = init_params(pkey)

    batch = 8
    # |y_true - y_pred| is non-negative
    x = jnp.abs(jax.random.normal(xkey, (batch, 1), dtype=jnp.float32))

    width = regression_scoring_mlp_forward(x, params)
    width = jax.block_until_ready(width)

    ref = jax.block_until_ready(_reference_forward(x, params))
    l2_reg = jax.block_until_ready(l2_regularization(params))

    assert width.shape == (batch, 1)
    assert bool(jnp.all(width >= MIN_WIDTH))
    assert bool(jnp.allclose(width, ref, rtol=1e-4, atol=1e-4))
    print("KERNEL_OK")
</pallas_src>

<mosaic_0001>
module attributes {stable_mosaic.version = 11 : i64} {
  func.func @_mlp_kernel(%arg0: i32, %arg1: memref<2x2048xf32, #tpu.memory_space<vmem>>, %arg2: memref<64x2xf32, #tpu.memory_space<vmem>>, %arg3: memref<32x64xf32, #tpu.memory_space<vmem>>, %arg4: memref<32x1xf32, #tpu.memory_space<vmem>>, %arg5: memref<1x32xf32, #tpu.memory_space<vmem>>, %arg6: memref<1x1xf32, #tpu.memory_space<vmem>>, %arg7: memref<1x2048xf32, #tpu.memory_space<vmem>>) attributes {dimension_semantics = [#tpu.dimension_semantics<parallel>], iteration_bounds = array<i64: 1>, scalar_prefetch = 0 : i64, scratch_operands = 0 : i64, tpu.core_type = #tpu.core_type<tc>, window_params = [{transform_indices = @transform_0, window_bounds = array<i64: 2, 2048>}, {pipeline_mode = #tpu.pipeline_mode<synchronous>, transform_indices = @transform_1, window_bounds = array<i64: 64, 2>}, {pipeline_mode = #tpu.pipeline_mode<synchronous>, transform_indices = @transform_2, window_bounds = array<i64: 32, 64>}, {pipeline_mode = #tpu.pipeline_mode<synchronous>, transform_indices = @transform_3, window_bounds = array<i64: 32, 1>}, {pipeline_mode = #tpu.pipeline_mode<synchronous>, transform_indices = @transform_4, window_bounds = array<i64: 1, 32>}, {pipeline_mode = #tpu.pipeline_mode<synchronous>, transform_indices = @transform_5, window_bounds = array<i64: 1, 1>}, {transform_indices = @transform_6, window_bounds = array<i64: 1, 2048>}]} {
    %c0 = arith.constant 0 : index
    %c0_0 = arith.constant 0 : index
    %0 = vector.load %arg2[%c0, %c0_0] : memref<64x2xf32, #tpu.memory_space<vmem>>, vector<64x2xf32>
    %c0_1 = arith.constant 0 : index
    %c0_2 = arith.constant 0 : index
    %1 = vector.load %arg3[%c0_1, %c0_2] : memref<32x64xf32, #tpu.memory_space<vmem>>, vector<32x64xf32>
    %c0_3 = arith.constant 0 : index
    %c0_4 = arith.constant 0 : index
    %2 = vector.load %arg5[%c0_3, %c0_4] : memref<1x32xf32, #tpu.memory_space<vmem>>, vector<1x32xf32>
    %c0_5 = arith.constant 0 : index
    %c0_6 = arith.constant 0 : index
    %3 = vector.load %arg4[%c0_5, %c0_6] : memref<32x1xf32, #tpu.memory_space<vmem>>, vector<32x1xf32>
    %4 = vector.shape_cast %3 : vector<32x1xf32> to vector<32x1xf32>
    %5 = vector.broadcast %4 : vector<32x1xf32> to vector<32x2048xf32>
    %c0_7 = arith.constant 0 : index
    %c0_8 = arith.constant 0 : index
    %6 = vector.load %arg6[%c0_7, %c0_8] : memref<1x1xf32, #tpu.memory_space<vmem>>, vector<1x1xf32>
    %7 = vector.shape_cast %6 : vector<1x1xf32> to vector<1x1xf32>
    %8 = vector.broadcast %7 : vector<1x1xf32> to vector<1x2048xf32>
    %c0_i32 = arith.constant 0 : i32
    %c2048_i32 = arith.constant 2048 : i32
    %9 = arith.muli %c0_i32, %c2048_i32 : i32
    %10 = tpu.assume_multiple %9, 2048 : i32
    %c0_9 = arith.constant 0 : index
    %11 = arith.index_cast %10 : i32 to index
    %12 = vector.load %arg1[%c0_9, %11] : memref<2x2048xf32, #tpu.memory_space<vmem>>, vector<2x2048xf32>
    %cst = arith.constant dense<0.000000e+00> : vector<64x2048xf32>
    %13 = tpu.matmul %0, %12, %cst {dimension_numbers = #tpu.dot_dimension_numbers<[1], [0], [0], [1], [0, 0, 1, 1], [], []>} : vector<64x2xf32>, vector<2x2048xf32>, vector<64x2048xf32> -> vector<64x2048xf32>
    %cst_10 = arith.constant 1.000000e-01 : f32
    %14 = vector.broadcast %cst_10 : f32 to vector<64x2048xf32>
    %15 = arith.mulf %14, %13 : vector<64x2048xf32>
    %16 = arith.maximumf %13, %15 : vector<64x2048xf32>
    %cst_11 = arith.constant dense<0.000000e+00> : vector<32x2048xf32>
    %17 = tpu.matmul %1, %16, %cst_11 {dimension_numbers = #tpu.dot_dimension_numbers<[1], [0], [0], [1], [0, 0, 1, 1], [], []>} : vector<32x64xf32>, vector<64x2048xf32>, vector<32x2048xf32> -> vector<32x2048xf32>
    %18 = arith.addf %17, %5 : vector<32x2048xf32>
    %cst_12 = arith.constant 1.000000e-01 : f32
    %19 = vector.broadcast %cst_12 : f32 to vector<32x2048xf32>
    %20 = arith.mulf %19, %18 : vector<32x2048xf32>
    %21 = arith.maximumf %18, %20 : vector<32x2048xf32>
    %cst_13 = arith.constant dense<0.000000e+00> : vector<1x2048xf32>
    %22 = tpu.matmul %2, %21, %cst_13 {dimension_numbers = #tpu.dot_dimension_numbers<[1], [0], [0], [1], [0, 0, 1, 1], [], []>} : vector<1x32xf32>, vector<32x2048xf32>, vector<1x2048xf32> -> vector<1x2048xf32>
    %23 = arith.addf %22, %8 : vector<1x2048xf32>
    %cst_14 = arith.constant 0.000000e+00 : f32
    %24 = vector.broadcast %cst_14 : f32 to vector<1x2048xf32>
    %25 = arith.maximumf %23, %24 : vector<1x2048xf32>
    %26 = math.absf %23 : vector<1x2048xf32>
    %cst_15 = arith.constant 0.000000e+00 : f32
    %27 = vector.broadcast %cst_15 : f32 to vector<1x2048xf32>
    %28 = arith.subf %27, %26 : vector<1x2048xf32>
    %29 = math.exp %28 : vector<1x2048xf32>
    %cst_16 = arith.constant 1.000000e+00 : f32
    %30 = vector.broadcast %cst_16 : f32 to vector<1x2048xf32>
    %31 = arith.addf %30, %29 : vector<1x2048xf32>
    %32 = math.log %31 : vector<1x2048xf32>
    %33 = arith.addf %25, %32 : vector<1x2048xf32>
    %cst_17 = arith.constant 1.000000e-01 : f32
    %34 = vector.broadcast %cst_17 : f32 to vector<1x2048xf32>
    %35 = arith.maximumf %33, %34 : vector<1x2048xf32>
    %c0_18 = arith.constant 0 : index
    %36 = arith.index_cast %10 : i32 to index
    %37 = vector.load %arg7[%c0_18, %36] : memref<1x2048xf32, #tpu.memory_space<vmem>>, vector<1x2048xf32>
    tpu.vector_store %arg7[%c0_18, %36], %35 {strides = array<i32>} : memref<1x2048xf32, #tpu.memory_space<vmem>>, vector<1x2048xf32>,
    %c1_i32 = arith.constant 1 : i32
    return
  }
  func.func @transform_0(%arg0: i32) -> (i32, i32) {
    %c0_i32 = arith.constant 0 : i32
    %c0_i32_0 = arith.constant 0 : i32
    return %c0_i32, %arg0 : i32, i32
  }
  func.func @transform_1(%arg0: i32) -> (i32, i32) {
    %c0_i32 = arith.constant 0 : i32
    %c0_i32_0 = arith.constant 0 : i32
    %c0_i32_1 = arith.constant 0 : i32
    return %c0_i32, %c0_i32_0 : i32, i32
  }
  func.func @transform_2(%arg0: i32) -> (i32, i32) {
    %c0_i32 = arith.constant 0 : i32
    %c0_i32_0 = arith.constant 0 : i32
    %c0_i32_1 = arith.constant 0 : i32
    return %c0_i32, %c0_i32_0 : i32, i32
  }
  func.func @transform_3(%arg0: i32) -> (i32, i32) {
    %c0_i32 = arith.constant 0 : i32
    %c0_i32_0 = arith.constant 0 : i32
    %c0_i32_1 = arith.constant 0 : i32
    return %c0_i32, %c0_i32_0 : i32, i32
  }
  func.func @transform_4(%arg0: i32) -> (i32, i32) {
    %c0_i32 = arith.constant 0 : i32
    %c0_i32_0 = arith.constant 0 : i32
    %c0_i32_1 = arith.constant 0 : i32
    return %c0_i32, %c0_i32_0 : i32, i32
  }
  func.func @transform_5(%arg0: i32) -> (i32, i32) {
    %c0_i32 = arith.constant 0 : i32
    %c0_i32_0 = arith.constant 0 : i32
    %c0_i32_1 = arith.constant 0 : i32
    return %c0_i32, %c0_i32_0 : i32, i32
  }
  func.func @transform_6(%arg0: i32) -> (i32, i32) {
    %c0_i32 = arith.constant 0 : i32
    %c0_i32_0 = arith.constant 0 : i32
    return %c0_i32, %arg0 : i32, i32
  }
}

</mosaic_0001>

<llo_original>
// kernel: tpu_custom_call.1
$region0: #{tpu_custom_call.1}
  #allocation0 [shape = 'u32[]', space=smem, size = 0x4, offset = 0x4, fixed_abs, tag = 'smem constant byte address 0x4 - core index']
  #allocation1 [shape = 'u32[72,128]{1,0:T(1,128)}', space=vmem, size = 0x9000, scoped, tag = 'internal scratch']
  #allocation2 [shape = 'f32[1,1]{1,0:T(1,128)S(1)}', space=vmem, size = 0x200, scoped, tag = 'scoped memory for tpu_custom_call.1']
  %s0 = inlined_call_operand.vmem [shape: f32[2,2048], index: 0, kind: input, shape index: {}]
  %s1 = inlined_call_operand.vmem [shape: f32[64,2], index: 1, kind: input, shape index: {}]
  %s2 = inlined_call_operand.vmem [shape: f32[32,64], index: 2, kind: input, shape index: {}]
  %s3 = inlined_call_operand.vmem [shape: f32[32,1], index: 3, kind: input, shape index: {}]
  %s4 = inlined_call_operand.vmem [shape: f32[1,32], index: 4, kind: input, shape index: {}]
  %s5 = inlined_call_operand.<no memory space> [shape: f32[1,1], index: 5, kind: input, shape index: {}]
  %s6 = inlined_call_operand.hbm [shape: f32[1,2048], index: 6, kind: output, shape index: {}]
  %s7 = sld [smem:[#allocation0]]
  $region34: #{tpu_custom_call.1} parent=0
    _
  %s9 = ssub.s32 1, %s7
  %s10 = scalar_select 0, %s9, %s7
  %v11 = vstv %s5
  %12 = vst [vmem:[#allocation2] sm:$0x1] %v11
  $region1: #{tpu_custom_call.1} parent=0
    #allocation3 [shape = 'u8[8192]{0}', space=vmem, size = 0x2000, scoped, tag = 'output window, operand 0, single buffered']
    #allocation4 [shape = 's32[1]{0}', space=sflag, size = 0x4, scoped, tag = 'scoped memory for tpu_custom_call.1']
    %13 = vsyncpa [#allocation4], 0
    // Predicated region
    $region2: #{tpu_custom_call.1} parent=1 // pred_check
      _
    $region3: #{tpu_custom_call.1} parent=1 // pred_check_branch
      %15 = sbr.rel (0) target = $region5
    $region4: #{tpu_custom_call.1} parent=1 // pred_region
      _
    $region5: #{tpu_custom_call.1} parent=1 // pred_fallthru
      _
    // Predicated region
    $region6: #{tpu_custom_call.1} parent=1 // pred_check
      _
    $region7: #{tpu_custom_call.1} parent=1 // pred_check_branch
      %17 = sbr.rel (0) target = $region9
    $region8: #{tpu_custom_call.1} parent=1 // pred_region
      _
    $region9: #{tpu_custom_call.1} parent=1 // pred_fallthru
      _
    // Predicated region
    $region10: #{tpu_custom_call.1} parent=1 // pred_check
      _
    $region11: #{tpu_custom_call.1} parent=1 // pred_check_branch
      %19 = sbr.rel (0) target = $region13
    $region12: #{tpu_custom_call.1} parent=1 // pred_region
      _
    $region13: #{tpu_custom_call.1} parent=1 // pred_fallthru
      _
    // Predicated region
    $region14: #{tpu_custom_call.1} parent=1 // pred_check
      _
    $region15: #{tpu_custom_call.1} parent=1 // pred_check_branch
      %21 = sbr.rel (0) target = $region17
    $region16: #{tpu_custom_call.1} parent=1 // pred_region
      _
    $region17: #{tpu_custom_call.1} parent=1 // pred_fallthru
      _
    // Predicated region
    $region18: #{tpu_custom_call.1} parent=1 // pred_check
      _
    $region19: #{tpu_custom_call.1} parent=1 // pred_check_branch
      %23 = sbr.rel (0) target = $region21
    $region20: #{tpu_custom_call.1} parent=1 // pred_region
      _
    $region21: #{tpu_custom_call.1} parent=1 // pred_fallthru
      _
    // Predicated region
    $region22: #{tpu_custom_call.1} parent=1 // pred_check
      _
    $region23: #{tpu_custom_call.1} parent=1 // pred_check_branch
      %25 = sbr.rel (0) target = $region25
    $region24: #{tpu_custom_call.1} parent=1 // pred_region
      _
    $region25: #{tpu_custom_call.1} parent=1 // pred_fallthru
      _
    %v26 = vld [vmem:[%s1] sm:$0xff]
    %v27 = vld [vmem:[%s1 + $0x8] sm:$0xff]
    %v28 = vld [vmem:[%s1 + $0x10] sm:$0xff]
    %v29 = vld [vmem:[%s1 + $0x18] sm:$0xff]
    %v30 = vld [vmem:[%s1 + $0x20] sm:$0xff]
    %v31 = vld [vmem:[%s1 + $0x28] sm:$0xff]
    %v32 = vld [vmem:[%s1 + $0x30] sm:$0xff]
    %v33 = vld [vmem:[%s1 + $0x38] sm:$0xff]
    %v34 = vld [vmem:[%s2] sm:$0xff]
    %v35 = vld [vmem:[%s2 + $0x8] sm:$0xff]
    %v36 = vld [vmem:[%s2 + $0x10] sm:$0xff]
    %v37 = vld [vmem:[%s2 + $0x18] sm:$0xff]
    %v38 = vld [vmem:[%s4] sm:$0x1]
    %v39 = vld [vmem:[%s3] sm:$0xff]
    %v40 = vld [vmem:[%s3 + $0x8] sm:$0xff]
    %v41 = vld [vmem:[%s3 + $0x10] sm:$0xff]
    %v42 = vld [vmem:[%s3 + $0x18] sm:$0xff]
    %44 = vset.pattern.permute.xlu0 0
    %45 = vperm.xlu0 %44, %v39
    %v46 = vpop.permute.xlu0 %45
    %49 = vset.pattern.permute.xlu0 0
    %50 = vperm.xlu0 %49, %v40
    %v51 = vpop.permute.xlu0 %50
    %54 = vset.pattern.permute.xlu0 0
    %55 = vperm.xlu0 %54, %v41
    %v56 = vpop.permute.xlu0 %55
    %59 = vset.pattern.permute.xlu0 0
    %60 = vperm.xlu0 %59, %v42
    %v61 = vpop.permute.xlu0 %60
    %v63 = vld [vmem:[#allocation2] sm:$0x1]
    %65 = vset.pattern.permute.xlu0 0
    %66 = vperm.xlu0 %65, %v63
    %v67 = vpop.permute.xlu0 %66
    %v69 = vperm.slane %v67, 0
    %v70 = vld [vmem:[%s0] sm:$0xff]
    %v71 = vld [vmem:[%s0 + $0x8] sm:$0xff]
    %v72 = vld [vmem:[%s0 + $0x10] sm:$0xff]
    %v73 = vld [vmem:[%s0 + $0x18] sm:$0xff]
    %78 = vst [vmem:[#allocation1] ss:$4 sm:$0xff] %v70
    %s79 = scalar_lea.vmem [#allocation1], 32
    %80 = vst [vmem:[%s79] ss:$4 sm:$0xff] %v71
    %v81 = vld.sshfl [vmem:[#allocation1] sm:$0xff pattern:$0x73625140]
    %v82 = vld.sshfl [vmem:[#allocation1 + $0x8] sm:$0xff pattern:$0x73625140]
    %v83 = vld.sshfl [vmem:[#allocation1 + $0x10] sm:$0xff pattern:$0x73625140]
    %v84 = vld.sshfl [vmem:[#allocation1 + $0x18] sm:$0xff pattern:$0x73625140]
    %v85 = vld.sshfl [vmem:[#allocation1 + $0x20] sm:$0xff pattern:$0x73625140]
    %v86 = vld.sshfl [vmem:[#allocation1 + $0x28] sm:$0xff pattern:$0x73625140]
    %v87 = vld.sshfl [vmem:[#allocation1 + $0x30] sm:$0xff pattern:$0x73625140]
    %v88 = vld.sshfl [vmem:[#allocation1 + $0x38] sm:$0xff pattern:$0x73625140]
    %89 = vst [vmem:[#allocation1] ss:$4 sm:$0xff] %v72
    %90 = vst [vmem:[%s79] ss:$4 sm:$0xff] %v73
    %v91 = vld.sshfl [vmem:[#allocation1] sm:$0xff pattern:$0x73625140]
    %v92 = vld.sshfl [vmem:[#allocation1 + $0x8] sm:$0xff pattern:$0x73625140]
    %v93 = vld.sshfl [vmem:[#allocation1 + $0x10] sm:$0xff pattern:$0x73625140]
    %v94 = vld.sshfl [vmem:[#allocation1 + $0x18] sm:$0xff pattern:$0x73625140]
    %v95 = vld.sshfl [vmem:[#allocation1 + $0x20] sm:$0xff pattern:$0x73625140]
    %v96 = vld.sshfl [vmem:[#allocation1 + $0x28] sm:$0xff pattern:$0x73625140]
    %v97 = vld.sshfl [vmem:[#allocation1 + $0x30] sm:$0xff pattern:$0x73625140]
    %v98 = vld.sshfl [vmem:[#allocation1 + $0x38] sm:$0xff pattern:$0x73625140]
    %vm99 = vcmask 15360
    %v101 = vsel %vm99, %v26, 0
    %v104 = vsel %vm99, %v27, 0
    %v107 = vsel %vm99, %v28, 0
    %v110 = vsel %vm99, %v29, 0
    %v113 = vsel %vm99, %v30, 0
    %v116 = vsel %vm99, %v31, 0
    %v119 = vsel %vm99, %v32, 0
    %v122 = vsel %vm99, %v33, 0
    %vm124 = vcmask 1041408
    %v125 = vsel %vm124, %v81, 0
    %v127 = vsel %vm124, %v82, 0
    %v129 = vsel %vm124, %v83, 0
    %v131 = vsel %vm124, %v84, 0
    %v133 = vsel %vm124, %v85, 0
    %v135 = vsel %vm124, %v86, 0
    %v137 = vsel %vm124, %v87, 0
    %v139 = vsel %vm124, %v88, 0
    %v141 = vsel %vm124, %v91, 0
    %v143 = vsel %vm124, %v92, 0
    %v145 = vsel %vm124, %v93, 0
    %v147 = vsel %vm124, %v94, 0
    %v149 = vsel %vm124, %v95, 0
    %v151 = vsel %vm124, %v96, 0
    %v153 = vsel %vm124, %v97, 0
    %v155 = vsel %vm124, %v98, 0
    %157 = vmatpush.msra.mxu0 0.0
    %158 = vmatpush.msra.mxu0 0.0
    %159 = vmatpush.msra.mxu0 0.0
    %160 = vmatpush.msra.mxu0 0.0
    %161 = vmatpush.msra.mxu0 0.0
    %162 = vmatpush.msra.mxu0 0.0
    %163 = vmatpush.msra.mxu0 0.0
    %164 = vmatpush.msra.mxu0 0.0
    %165 = vmatpush.msra.mxu0 0.0
    %166 = vmatpush.msra.mxu0 0.0
    %167 = vmatpush.msra.mxu0 0.0
    %168 = vmatpush.msra.mxu0 0.0
    %169 = vmatpush.msra.mxu0 0.0
    %170 = vmatpush.msra.mxu0 0.0
    %171 = vmatpush.msra.mxu0 0.0
    %172 = vmatpush.msra.mxu0 %v125
    %173 = vmatmul.f32.gmra.mxu0 %v101
    %v174 = vpop.f32.mrf.mxu0
    %v175 = vadd.f32 0.0, %v174
    %176 = vmatmul.f32.gmra.mxu0 %v104
    %v177 = vpop.f32.mrf.mxu0
    %v178 = vadd.f32 0.0, %v177
    %179 = vmatmul.f32.gmra.mxu0 %v107
    %v180 = vpop.f32.mrf.mxu0
    %v181 = vadd.f32 0.0, %v180
    %182 = vmatmul.f32.gmra.mxu0 %v110
    %v183 = vpop.f32.mrf.mxu0
    %v184 = vadd.f32 0.0, %v183
    %185 = vmatmul.f32.gmra.mxu0 %v113
    %v186 = vpop.f32.mrf.mxu0
    %v187 = vadd.f32 0.0, %v186
    %188 = vmatmul.f32.gmra.mxu0 %v116
    %v189 = vpop.f32.mrf.mxu0
    %v190 = vadd.f32 0.0, %v189
    %191 = vmatmul.f32.gmra.mxu0 %v119
    %v192 = vpop.f32.mrf.mxu0
    %v193 = vadd.f32 0.0, %v192
    %194 = vmatmul.f32.gmra.mxu0 %v122
    %v195 = vpop.f32.mrf.mxu0
    %v196 = vadd.f32 0.0, %v195
    %197 = vdwg.mxu0
    %198 = vmatpush.msra.mxu0 0.0
    %199 = vmatpush.msra.mxu0 0.0
    %200 = vmatpush.msra.mxu0 0.0
    %201 = vmatpush.msra.mxu0 0.0
    %202 = vmatpush.msra.mxu0 0.0
    %203 = vmatpush.msra.mxu0 0.0
    %204 = vmatpush.msra.mxu0 0.0
    %205 = vmatpush.msra.mxu0 0.0
    %206 = vmatpush.msra.mxu0 0.0
    %207 = vmatpush.msra.mxu0 0.0
    %208 = vmatpush.msra.mxu0 0.0
    %209 = vmatpush.msra.mxu0 0.0
    %210 = vmatpush.msra.mxu0 0.0
    %211 = vmatpush.msra.mxu0 0.0
    %212 = vmatpush.msra.mxu0 0.0
    %213 = vmatpush.msra.mxu0 %v127
    %214 = vmatmul.f32.gmra.mxu0 %v101
    %v215 = vpop.f32.mrf.mxu0
    %v216 = vadd.f32 0.0, %v215
    %217 = vmatmul.f32.gmra.mxu0 %v104
    %v218 = vpop.f32.mrf.mxu0
    %v219 = vadd.f32 0.0, %v218
    %220 = vmatmul.f32.gmra.mxu0 %v107
    %v221 = vpop.f32.mrf.mxu0
    %v222 = vadd.f32 0.0, %v221
    %223 = vmatmul.f32.gmra.mxu0 %v110
    %v224 = vpop.f32.mrf.mxu0
    %v225 = vadd.f32 0.0, %v224
    %226 = vmatmul.f32.gmra.mxu0 %v113
    %v227 = vpop.f32.mrf.mxu0
    %v228 = vadd.f32 0.0, %v227
    %229 = vmatmul.f32.gmra.mxu0 %v116
    %v230 = vpop.f32.mrf.mxu0
    %v231 = vadd.f32 0.0, %v230
    %232 = vmatmul.f32.gmra.mxu0 %v119
    %v233 = vpop.f32.mrf.mxu0
    %v234 = vadd.f32 0.0, %v233
    %235 = vmatmul.f32.gmra.mxu0 %v122
    %v236 = vpop.f32.mrf.mxu0
    %v237 = vadd.f32 0.0, %v236
    %238 = vdwg.mxu0
    %239 = vmatpush.msra.mxu0 0.0
    %240 = vmatpush.msra.mxu0 0.0
    %241 = vmatpush.msra.mxu0 0.0
    %242 = vmatpush.msra.mxu0 0.0
    %243 = vmatpush.msra.mxu0 0.0
    %244 = vmatpush.msra.mxu0 0.0
    %245 = vmatpush.msra.mxu0 0.0
    %246 = vmatpush.msra.mxu0 0.0
    %247 = vmatpush.msra.mxu0 0.0
    %248 = vmatpush.msra.mxu0 0.0
    %249 = vmatpush.msra.mxu0 0.0
    %250 = vmatpush.msra.mxu0 0.0
    %251 = vmatpush.msra.mxu0 0.0
    %252 = vmatpush.msra.mxu0 0.0
    %253 = vmatpush.msra.mxu0 0.0
    %254 = vmatpush.msra.mxu0 %v129
    %255 = vmatmul.f32.gmra.mxu0 %v101
    %v256 = vpop.f32.mrf.mxu0
    %v257 = vadd.f32 0.0, %v256
    %258 = vmatmul.f32.gmra.mxu0 %v104
    %v259 = vpop.f32.mrf.mxu0
    %v260 = vadd.f32 0.0, %v259
    %261 = vmatmul.f32.gmra.mxu0 %v107
    %v262 = vpop.f32.mrf.mxu0
    %v263 = vadd.f32 0.0, %v262
    %264 = vmatmul.f32.gmra.mxu0 %v110
    %v265 = vpop.f32.mrf.mxu0
    %v266 = vadd.f32 0.0, %v265
    %267 = vmatmul.f32.gmra.mxu0 %v113
    %v268 = vpop.f32.mrf.mxu0
    %v269 = vadd.f32 0.0, %v268
    %270 = vmatmul.f32.gmra.mxu0 %v116
    %v271 = vpop.f32.mrf.mxu0
    %v272 = vadd.f32 0.0, %v271
    %273 = vmatmul.f32.gmra.mxu0 %v119
    %v274 = vpop.f32.mrf.mxu0
    %v275 = vadd.f32 0.0, %v274
    %276 = vmatmul.f32.gmra.mxu0 %v122
    %v277 = vpop.f32.mrf.mxu0
    %v278 = vadd.f32 0.0, %v277
    %279 = vdwg.mxu0
    %280 = vmatpush.msra.mxu0 0.0
    %281 = vmatpush.msra.mxu0 0.0
    %282 = vmatpush.msra.mxu0 0.0
    %283 = vmatpush.msra.mxu0 0.0
    %284 = vmatpush.msra.mxu0 0.0
    %285 = vmatpush.msra.mxu0 0.0
    %286 = vmatpush.msra.mxu0 0.0
    %287 = vmatpush.msra.mxu0 0.0
    %288 = vmatpush.msra.mxu0 0.0
    %289 = vmatpush.msra.mxu0 0.0
    %290 = vmatpush.msra.mxu0 0.0
    %291 = vmatpush.msra.mxu0 0.0
    %292 = vmatpush.msra.mxu0 0.0
    %293 = vmatpush.msra.mxu0 0.0
    %294 = vmatpush.msra.mxu0 0.0
    %295 = vmatpush.msra.mxu0 %v131
    %296 = vmatmul.f32.gmra.mxu0 %v101
    %v297 = vpop.f32.mrf.mxu0
    %v298 = vadd.f32 0.0, %v297
    %299 = vmatmul.f32.gmra.mxu0 %v104
    %v300 = vpop.f32.mrf.mxu0
    %v301 = vadd.f32 0.0, %v300
    %302 = vmatmul.f32.gmra.mxu0 %v107
    %v303 = vpop.f32.mrf.mxu0
    %v304 = vadd.f32 0.0, %v303
    %305 = vmatmul.f32.gmra.mxu0 %v110
    %v306 = vpop.f32.mrf.mxu0
    %v307 = vadd.f32 0.0, %v306
    %308 = vmatmul.f32.gmra.mxu0 %v113
    %v309 = vpop.f32.mrf.mxu0
    %v310 = vadd.f32 0.0, %v309
    %311 = vmatmul.f32.gmra.mxu0 %v116
    %v312 = vpop.f32.mrf.mxu0
    %v313 = vadd.f32 0.0, %v312
    %314 = vmatmul.f32.gmra.mxu0 %v119
    %v315 = vpop.f32.mrf.mxu0
    %v316 = vadd.f32 0.0, %v315
    %317 = vmatmul.f32.gmra.mxu0 %v122
    %v318 = vpop.f32.mrf.mxu0
    %v319 = vadd.f32 0.0, %v318
    %320 = vdwg.mxu0
    %321 = vmatpush.msra.mxu0 0.0
    %322 = vmatpush.msra.mxu0 0.0
    %323 = vmatpush.msra.mxu0 0.0
    %324 = vmatpush.msra.mxu0 0.0
    %325 = vmatpush.msra.mxu0 0.0
    %326 = vmatpush.msra.mxu0 0.0
    %327 = vmatpush.msra.mxu0 0.0
    %328 = vmatpush.msra.mxu0 0.0
    %329 = vmatpush.msra.mxu0 0.0
    %330 = vmatpush.msra.mxu0 0.0
    %331 = vmatpush.msra.mxu0 0.0
    %332 = vmatpush.msra.mxu0 0.0
    %333 = vmatpush.msra.mxu0 0.0
    %334 = vmatpush.msra.mxu0 0.0
    %335 = vmatpush.msra.mxu0 0.0
    %336 = vmatpush.msra.mxu0 %v133
    %337 = vmatmul.f32.gmra.mxu0 %v101
    %v338 = vpop.f32.mrf.mxu0
    %v339 = vadd.f32 0.0, %v338
    %340 = vmatmul.f32.gmra.mxu0 %v104
    %v341 = vpop.f32.mrf.mxu0
    %v342 = vadd.f32 0.0, %v341
    %343 = vmatmul.f32.gmra.mxu0 %v107
    %v344 = vpop.f32.mrf.mxu0
    %v345 = vadd.f32 0.0, %v344
    %346 = vmatmul.f32.gmra.mxu0 %v110
    %v347 = vpop.f32.mrf.mxu0
    %v348 = vadd.f32 0.0, %v347
    %349 = vmatmul.f32.gmra.mxu0 %v113
    %v350 = vpop.f32.mrf.mxu0
    %v351 = vadd.f32 0.0, %v350
    %352 = vmatmul.f32.gmra.mxu0 %v116
    %v353 = vpop.f32.mrf.mxu0
    %v354 = vadd.f32 0.0, %v353
    %355 = vmatmul.f32.gmra.mxu0 %v119
    %v356 = vpop.f32.mrf.mxu0
    %v357 = vadd.f32 0.0, %v356
    %358 = vmatmul.f32.gmra.mxu0 %v122
    %v359 = vpop.f32.mrf.mxu0
    %v360 = vadd.f32 0.0, %v359
    %361 = vdwg.mxu0
    %362 = vmatpush.msra.mxu0 0.0
    %363 = vmatpush.msra.mxu0 0.0
    %364 = vmatpush.msra.mxu0 0.0
    %365 = vmatpush.msra.mxu0 0.0
    %366 = vmatpush.msra.mxu0 0.0
    %367 = vmatpush.msra.mxu0 0.0
    %368 = vmatpush.msra.mxu0 0.0
    %369 = vmatpush.msra.mxu0 0.0
    %370 = vmatpush.msra.mxu0 0.0
    %371 = vmatpush.msra.mxu0 0.0
    %372 = vmatpush.msra.mxu0 0.0
    %373 = vmatpush.msra.mxu0 0.0
    %374 = vmatpush.msra.mxu0 0.0
    %375 = vmatpush.msra.mxu0 0.0
    %376 = vmatpush.msra.mxu0 0.0
    %377 = vmatpush.msra.mxu0 %v135
    %378 = vmatmul.f32.gmra.mxu0 %v101
    %v379 = vpop.f32.mrf.mxu0
    %v380 = vadd.f32 0.0, %v379
    %381 = vmatmul.f32.gmra.mxu0 %v104
    %v382 = vpop.f32.mrf.mxu0
    %v383 = vadd.f32 0.0, %v382
    %384 = vmatmul.f32.gmra.mxu0 %v107
    %v385 = vpop.f32.mrf.mxu0
    %v386 = vadd.f32 0.0, %v385
    %387 = vmatmul.f32.gmra.mxu0 %v110
    %v388 = vpop.f32.mrf.mxu0
    %v389 = vadd.f32 0.0, %v388
    %390 = vmatmul.f32.gmra.mxu0 %v113
    %v391 = vpop.f32.mrf.mxu0
    %v392 = vadd.f32 0.0, %v391
    %393 = vmatmul.f32.gmra.mxu0 %v116
    %v394 = vpop.f32.mrf.mxu0
    %v395 = vadd.f32 0.0, %v394
    %396 = vmatmul.f32.gmra.mxu0 %v119
    %v397 = vpop.f32.mrf.mxu0
    %v398 = vadd.f32 0.0, %v397
    %399 = vmatmul.f32.gmra.mxu0 %v122
    %v400 = vpop.f32.mrf.mxu0
    %v401 = vadd.f32 0.0, %v400
    %402 = vdwg.mxu0
    %403 = vmatpush.msra.mxu0 0.0
    %404 = vmatpush.msra.mxu0 0.0
    %405 = vmatpush.msra.mxu0 0.0
    %406 = vmatpush.msra.mxu0 0.0
    %407 = vmatpush.msra.mxu0 0.0
    %408 = vmatpush.msra.mxu0 0.0
    %409 = vmatpush.msra.mxu0 0.0
    %410 = vmatpush.msra.mxu0 0.0
    %411 = vmatpush.msra.mxu0 0.0
    %412 = vmatpush.msra.mxu0 0.0
    %413 = vmatpush.msra.mxu0 0.0
    %414 = vmatpush.msra.mxu0 0.0
    %415 = vmatpush.msra.mxu0 0.0
    %416 = vmatpush.msra.mxu0 0.0
    %417 = vmatpush.msra.mxu0 0.0
    %418 = vmatpush.msra.mxu0 %v137
    %419 = vmatmul.f32.gmra.mxu0 %v101
    %v420 = vpop.f32.mrf.mxu0
    %v421 = vadd.f32 0.0, %v420
    %422 = vmatmul.f32.gmra.mxu0 %v104
    %v423 = vpop.f32.mrf.mxu0
    %v424 = vadd.f32 0.0, %v423
    %425 = vmatmul.f32.gmra.mxu0 %v107
    %v426 = vpop.f32.mrf.mxu0
    %v427 = vadd.f32 0.0, %v426
    %428 = vmatmul.f32.gmra.mxu0 %v110
    %v429 = vpop.f32.mrf.mxu0
    %v430 = vadd.f32 0.0, %v429
    %431 = vmatmul.f32.gmra.mxu0 %v113
    %v432 = vpop.f32.mrf.mxu0
    %v433 = vadd.f32 0.0, %v432
    %434 = vmatmul.f32.gmra.mxu0 %v116
    %v435 = vpop.f32.mrf.mxu0
    %v436 = vadd.f32 0.0, %v435
    %437 = vmatmul.f32.gmra.mxu0 %v119
    %v438 = vpop.f32.mrf.mxu0
    %v439 = vadd.f32 0.0, %v438
    %440 = vmatmul.f32.gmra.mxu0 %v122
    %v441 = vpop.f32.mrf.mxu0
    %v442 = vadd.f32 0.0, %v441
    %443 = vdwg.mxu0
    %444 = vmatpush.msra.mxu0 0.0
    %445 = vmatpush.msra.mxu0 0.0
    %446 = vmatpush.msra.mxu0 0.0
    %447 = vmatpush.msra.mxu0 0.0
    %448 = vmatpush.msra.mxu0 0.0
    %449 = vmatpush.msra.mxu0 0.0
    %450 = vmatpush.msra.mxu0 0.0
    %451 = vmatpush.msra.mxu0 0.0
    %452 = vmatpush.msra.mxu0 0.0
    %453 = vmatpush.msra.mxu0 0.0
    %454 = vmatpush.msra.mxu0 0.0
    %455 = vmatpush.msra.mxu0 0.0
    %456 = vmatpush.msra.mxu0 0.0
    %457 = vmatpush.msra.mxu0 0.0
    %458 = vmatpush.msra.mxu0 0.0
    %459 = vmatpush.msra.mxu0 %v139
    %460 = vmatmul.f32.gmra.mxu0 %v101
    %v461 = vpop.f32.mrf.mxu0
    %v462 = vadd.f32 0.0, %v461
    %463 = vmatmul.f32.gmra.mxu0 %v104
    %v464 = vpop.f32.mrf.mxu0
    %v465 = vadd.f32 0.0, %v464
    %466 = vmatmul.f32.gmra.mxu0 %v107
    %v467 = vpop.f32.mrf.mxu0
    %v468 = vadd.f32 0.0, %v467
    %469 = vmatmul.f32.gmra.mxu0 %v110
    %v470 = vpop.f32.mrf.mxu0
    %v471 = vadd.f32 0.0, %v470
    %472 = vmatmul.f32.gmra.mxu0 %v113
    %v473 = vpop.f32.mrf.mxu0
    %v474 = vadd.f32 0.0, %v473
    %475 = vmatmul.f32.gmra.mxu0 %v116
    %v476 = vpop.f32.mrf.mxu0
    %v477 = vadd.f32 0.0, %v476
    %478 = vmatmul.f32.gmra.mxu0 %v119
    %v479 = vpop.f32.mrf.mxu0
    %v480 = vadd.f32 0.0, %v479
    %481 = vmatmul.f32.gmra.mxu0 %v122
    %v482 = vpop.f32.mrf.mxu0
    %v483 = vadd.f32 0.0, %v482
    %484 = vdwg.mxu0
    %485 = vmatpush.msra.mxu0 0.0
    %486 = vmatpush.msra.mxu0 0.0
    %487 = vmatpush.msra.mxu0 0.0
    %488 = vmatpush.msra.mxu0 0.0
    %489 = vmatpush.msra.mxu0 0.0
    %490 = vmatpush.msra.mxu0 0.0
    %491 = vmatpush.msra.mxu0 0.0
    %492 = vmatpush.msra.mxu0 0.0
    %493 = vmatpush.msra.mxu0 0.0
    %494 = vmatpush.msra.mxu0 0.0
    %495 = vmatpush.msra.mxu0 0.0
    %496 = vmatpush.msra.mxu0 0.0
    %497 = vmatpush.msra.mxu0 0.0
    %498 = vmatpush.msra.mxu0 0.0
    %499 = vmatpush.msra.mxu0 0.0
    %500 = vmatpush.msra.mxu0 %v141
    %501 = vmatmul.f32.gmra.mxu0 %v101
    %v502 = vpop.f32.mrf.mxu0
    %v503 = vadd.f32 0.0, %v502
    %504 = vmatmul.f32.gmra.mxu0 %v104
    %v505 = vpop.f32.mrf.mxu0
    %v506 = vadd.f32 0.0, %v505
    %507 = vmatmul.f32.gmra.mxu0 %v107
    %v508 = vpop.f32.mrf.mxu0
    %v509 = vadd.f32 0.0, %v508
    %510 = vmatmul.f32.gmra.mxu0 %v110
    %v511 = vpop.f32.mrf.mxu0
    %v512 = vadd.f32 0.0, %v511
    %513 = vmatmul.f32.gmra.mxu0 %v113
    %v514 = vpop.f32.mrf.mxu0
    %v515 = vadd.f32 0.0, %v514
    %516 = vmatmul.f32.gmra.mxu0 %v116
    %v517 = vpop.f32.mrf.mxu0
    %v518 = vadd.f32 0.0, %v517
    %519 = vmatmul.f32.gmra.mxu0 %v119
    %v520 = vpop.f32.mrf.mxu0
    %v521 = vadd.f32 0.0, %v520
    %522 = vmatmul.f32.gmra.mxu0 %v122
    %v523 = vpop.f32.mrf.mxu0
    %v524 = vadd.f32 0.0, %v523
    %525 = vdwg.mxu0
    %526 = vmatpush.msra.mxu0 0.0
    %527 = vmatpush.msra.mxu0 0.0
    %528 = vmatpush.msra.mxu0 0.0
    %529 = vmatpush.msra.mxu0 0.0
    %530 = vmatpush.msra.mxu0 0.0
    %531 = vmatpush.msra.mxu0 0.0
    %532 = vmatpush.msra.mxu0 0.0
    %533 = vmatpush.msra.mxu0 0.0
    %534 = vmatpush.msra.mxu0 0.0
    %535 = vmatpush.msra.mxu0 0.0
    %536 = vmatpush.msra.mxu0 0.0
    %537 = vmatpush.msra.mxu0 0.0
    %538 = vmatpush.msra.mxu0 0.0
    %539 = vmatpush.msra.mxu0 0.0
    %540 = vmatpush.msra.mxu0 0.0
    %541 = vmatpush.msra.mxu0 %v143
    %542 = vmatmul.f32.gmra.mxu0 %v101
    %v543 = vpop.f32.mrf.mxu0
    %v544 = vadd.f32 0.0, %v543
    %545 = vmatmul.f32.gmra.mxu0 %v104
    %v546 = vpop.f32.mrf.mxu0
    %v547 = vadd.f32 0.0, %v546
    %548 = vmatmul.f32.gmra.mxu0 %v107
    %v549 = vpop.f32.mrf.mxu0
    %v550 = vadd.f32 0.0, %v549
    %551 = vmatmul.f32.gmra.mxu0 %v110
    %v552 = vpop.f32.mrf.mxu0
    %v553 = vadd.f32 0.0, %v552
    %554 = vmatmul.f32.gmra.mxu0 %v113
    %v555 = vpop.f32.mrf.mxu0
    %v556 = vadd.f32 0.0, %v555
    %557 = vmatmul.f32.gmra.mxu0 %v116
    %v558 = vpop.f32.mrf.mxu0
    %v559 = vadd.f32 0.0, %v558
    %560 = vmatmul.f32.gmra.mxu0 %v119
    %v561 = vpop.f32.mrf.mxu0
    %v562 = vadd.f32 0.0, %v561
    %563 = vmatmul.f32.gmra.mxu0 %v122
    %v564 = vpop.f32.mrf.mxu0
    %v565 = vadd.f32 0.0, %v564
    %566 = vdwg.mxu0
    %567 = vmatpush.msra.mxu0 0.0
    %568 = vmatpush.msra.mxu0 0.0
    %569 = vmatpush.msra.mxu0 0.0
    %570 = vmatpush.msra.mxu0 0.0
    %571 = vmatpush.msra.mxu0 0.0
    %572 = vmatpush.msra.mxu0 0.0
    %573 = vmatpush.msra.mxu0 0.0
    %574 = vmatpush.msra.mxu0 0.0
    %575 = vmatpush.msra.mxu0 0.0
    %576 = vmatpush.msra.mxu0 0.0
    %577 = vmatpush.msra.mxu0 0.0
    %578 = vmatpush.msra.mxu0 0.0
    %579 = vmatpush.msra.mxu0 0.0
    %580 = vmatpush.msra.mxu0 0.0
    %581 = vmatpush.msra.mxu0 0.0
    %582 = vmatpush.msra.mxu0 %v145
    %583 = vmatmul.f32.gmra.mxu0 %v101
    %v584 = vpop.f32.mrf.mxu0
    %v585 = vadd.f32 0.0, %v584
    %586 = vmatmul.f32.gmra.mxu0 %v104
    %v587 = vpop.f32.mrf.mxu0
    %v588 = vadd.f32 0.0, %v587
    %589 = vmatmul.f32.gmra.mxu0 %v107
    %v590 = vpop.f32.mrf.mxu0
    %v591 = vadd.f32 0.0, %v590
    %592 = vmatmul.f32.gmra.mxu0 %v110
    %v593 = vpop.f32.mrf.mxu0
    %v594 = vadd.f32 0.0, %v593
    %595 = vmatmul.f32.gmra.mxu0 %v113
    %v596 = vpop.f32.mrf.mxu0
    %v597 = vadd.f32 0.0, %v596
    %598 = vmatmul.f32.gmra.mxu0 %v116
    %v599 = vpop.f32.mrf.mxu0
    %v600 = vadd.f32 0.0, %v599
    %601 = vmatmul.f32.gmra.mxu0 %v119
    %v602 = vpop.f32.mrf.mxu0
    %v603 = vadd.f32 0.0, %v602
    %604 = vmatmul.f32.gmra.mxu0 %v122
    %v605 = vpop.f32.mrf.mxu0
    %v606 = vadd.f32 0.0, %v605
    %607 = vdwg.mxu0
    %608 = vmatpush.msra.mxu0 0.0
    %609 = vmatpush.msra.mxu0 0.0
    %610 = vmatpush.msra.mxu0 0.0
    %611 = vmatpush.msra.mxu0 0.0
    %612 = vmatpush.msra.mxu0 0.0
    %613 = vmatpush.msra.mxu0 0.0
    %614 = vmatpush.msra.mxu0 0.0
    %615 = vmatpush.msra.mxu0 0.0
    %616 = vmatpush.msra.mxu0 0.0
    %617 = vmatpush.msra.mxu0 0.0
    %618 = vmatpush.msra.mxu0 0.0
    %619 = vmatpush.msra.mxu0 0.0
    %620 = vmatpush.msra.mxu0 0.0
    %621 = vmatpush.msra.mxu0 0.0
    %622 = vmatpush.msra.mxu0 0.0
    %623 = vmatpush.msra.mxu0 %v147
    %624 = vmatmul.f32.gmra.mxu0 %v101
    %v625 = vpop.f32.mrf.mxu0
    %v626 = vadd.f32 0.0, %v625
    %627 = vmatmul.f32.gmra.mxu0 %v104
    %v628 = vpop.f32.mrf.mxu0
    %v629 = vadd.f32 0.0, %v628
    %630 = vmatmul.f32.gmra.mxu0 %v107
    %v631 = vpop.f32.mrf.mxu0
    %v632 = vadd.f32 0.0, %v631
    %633 = vmatmul.f32.gmra.mxu0 %v110
    %v634 = vpop.f32.mrf.mxu0
    %v635 = vadd.f32 0.0, %v634
    %636 = vmatmul.f32.gmra.mxu0 %v113
    %v637 = vpop.f32.mrf.mxu0
    %v638 = vadd.f32 0.0, %v637
    %639 = vmatmul.f32.gmra.mxu0 %v116
    %v640 = vpop.f32.mrf.mxu0
    %v641 = vadd.f32 0.0, %v640
    %642 = vmatmul.f32.gmra.mxu0 %v119
    %v643 = vpop.f32.mrf.mxu0
    %v644 = vadd.f32 0.0, %v643
    %645 = vmatmul.f32.gmra.mxu0 %v122
    %v646 = vpop.f32.mrf.mxu0
    %v647 = vadd.f32 0.0, %v646
    %648 = vdwg.mxu0
    %649 = vmatpush.msra.mxu0 0.0
    %650 = vmatpush.msra.mxu0 0.0
    %651 = vmatpush.msra.mxu0 0.0
    %652 = vmatpush.msra.mxu0 0.0
    %653 = vmatpush.msra.mxu0 0.0
    %654 = vmatpush.msra.mxu0 0.0
    %655 = vmatpush.msra.mxu0 0.0
    %656 = vmatpush.msra.mxu0 0.0
    %657 = vmatpush.msra.mxu0 0.0
    %658 = vmatpush.msra.mxu0 0.0
    %659 = vmatpush.msra.mxu0 0.0
    %660 = vmatpush.msra.mxu0 0.0
    %661 = vmatpush.msra.mxu0 0.0
    %662 = vmatpush.msra.mxu0 0.0
    %663 = vmatpush.msra.mxu0 0.0
    %664 = vmatpush.msra.mxu0 %v149
    %665 = vmatmul.f32.gmra.mxu0 %v101
    %v666 = vpop.f32.mrf.mxu0
    %v667 = vadd.f32 0.0, %v666
    %668 = vmatmul.f32.gmra.mxu0 %v104
    %v669 = vpop.f32.mrf.mxu0
    %v670 = vadd.f32 0.0, %v669
    %671 = vmatmul.f32.gmra.mxu0 %v107
    %v672 = vpop.f32.mrf.mxu0
    %v673 = vadd.f32 0.0, %v672
    %674 = vmatmul.f32.gmra.mxu0 %v110
    %v675 = vpop.f32.mrf.mxu0
    %v676 = vadd.f32 0.0, %v675
    %677 = vmatmul.f32.gmra.mxu0 %v113
    %v678 = vpop.f32.mrf.mxu0
    %v679 = vadd.f32 0.0, %v678
    %680 = vmatmul.f32.gmra.mxu0 %v116
    %v681 = vpop.f32.mrf.mxu0
    %v682 = vadd.f32 0.0, %v681
    %683 = vmatmul.f32.gmra.mxu0 %v119
    %v684 = vpop.f32.mrf.mxu0
    %v685 = vadd.f32 0.0, %v684
    %686 = vmatmul.f32.gmra.mxu0 %v122
    %v687 = vpop.f32.mrf.mxu0
    %v688 = vadd.f32 0.0, %v687
    %689 = vdwg.mxu0
    %690 = vmatpush.msra.mxu0 0.0
    %691 = vmatpush.msra.mxu0 0.0
    %692 = vmatpush.msra.mxu0 0.0
    %693 = vmatpush.msra.mxu0 0.0
    %694 = vmatpush.msra.mxu0 0.0
    %695 = vmatpush.msra.mxu0 0.0
    %696 = vmatpush.msra.mxu0 0.0
    %697 = vmatpush.msra.mxu0 0.0
    %698 = vmatpush.msra.mxu0 0.0
    %699 = vmatpush.msra.mxu0 0.0
    %700 = vmatpush.msra.mxu0 0.0
    %701 = vmatpush.msra.mxu0 0.0
    %702 = vmatpush.msra.mxu0 0.0
    %703 = vmatpush.msra.mxu0 0.0
    %704 = vmatpush.msra.mxu0 0.0
    %705 = vmatpush.msra.mxu0 %v151
    %706 = vmatmul.f32.gmra.mxu0 %v101
    %v707 = vpop.f32.mrf.mxu0
    %v708 = vadd.f32 0.0, %v707
    %709 = vmatmul.f32.gmra.mxu0 %v104
    %v710 = vpop.f32.mrf.mxu0
    %v711 = vadd.f32 0.0, %v710
    %712 = vmatmul.f32.gmra.mxu0 %v107
    %v713 = vpop.f32.mrf.mxu0
    %v714 = vadd.f32 0.0, %v713
    %715 = vmatmul.f32.gmra.mxu0 %v110
    %v716 = vpop.f32.mrf.mxu0
    %v717 = vadd.f32 0.0, %v716
    %718 = vmatmul.f32.gmra.mxu0 %v113
    %v719 = vpop.f32.mrf.mxu0
    %v720 = vadd.f32 0.0, %v719
    %721 = vmatmul.f32.gmra.mxu0 %v116
    %v722 = vpop.f32.mrf.mxu0
    %v723 = vadd.f32 0.0, %v722
    %724 = vmatmul.f32.gmra.mxu0 %v119
    %v725 = vpop.f32.mrf.mxu0
    %v726 = vadd.f32 0.0, %v725
    %727 = vmatmul.f32.gmra.mxu0 %v122
    %v728 = vpop.f32.mrf.mxu0
    %v729 = vadd.f32 0.0, %v728
    %730 = vdwg.mxu0
    %731 = vmatpush.msra.mxu0 0.0
    %732 = vmatpush.msra.mxu0 0.0
    %733 = vmatpush.msra.mxu0 0.0
    %734 = vmatpush.msra.mxu0 0.0
    %735 = vmatpush.msra.mxu0 0.0
    %736 = vmatpush.msra.mxu0 0.0
    %737 = vmatpush.msra.mxu0 0.0
    %738 = vmatpush.msra.mxu0 0.0
    %739 = vmatpush.msra.mxu0 0.0
    %740 = vmatpush.msra.mxu0 0.0
    %741 = vmatpush.msra.mxu0 0.0
    %742 = vmatpush.msra.mxu0 0.0
    %743 = vmatpush.msra.mxu0 0.0
    %744 = vmatpush.msra.mxu0 0.0
    %745 = vmatpush.msra.mxu0 0.0
    %746 = vmatpush.msra.mxu0 %v153
    %747 = vmatmul.f32.gmra.mxu0 %v101
    %v748 = vpop.f32.mrf.mxu0
    %v749 = vadd.f32 0.0, %v748
    %750 = vmatmul.f32.gmra.mxu0 %v104
    %v751 = vpop.f32.mrf.mxu0
    %v752 = vadd.f32 0.0, %v751
    %753 = vmatmul.f32.gmra.mxu0 %v107
    %v754 = vpop.f32.mrf.mxu0
    %v755 = vadd.f32 0.0, %v754
    %756 = vmatmul.f32.gmra.mxu0 %v110
    %v757 = vpop.f32.mrf.mxu0
    %v758 = vadd.f32 0.0, %v757
    %759 = vmatmul.f32.gmra.mxu0 %v113
    %v760 = vpop.f32.mrf.mxu0
    %v761 = vadd.f32 0.0, %v760
    %762 = vmatmul.f32.gmra.mxu0 %v116
    %v763 = vpop.f32.mrf.mxu0
    %v764 = vadd.f32 0.0, %v763
    %765 = vmatmul.f32.gmra.mxu0 %v119
    %v766 = vpop.f32.mrf.mxu0
    %v767 = vadd.f32 0.0, %v766
    %768 = vmatmul.f32.gmra.mxu0 %v122
    %v769 = vpop.f32.mrf.mxu0
    %v770 = vadd.f32 0.0, %v769
    %771 = vdwg.mxu0
    %772 = vmatpush.msra.mxu0 0.0
    %773 = vmatpush.msra.mxu0 0.0
    %774 = vmatpush.msra.mxu0 0.0
    %775 = vmatpush.msra.mxu0 0.0
    %776 = vmatpush.msra.mxu0 0.0
    %777 = vmatpush.msra.mxu0 0.0
    %778 = vmatpush.msra.mxu0 0.0
    %779 = vmatpush.msra.mxu0 0.0
    %780 = vmatpush.msra.mxu0 0.0
    %781 = vmatpush.msra.mxu0 0.0
    %782 = vmatpush.msra.mxu0 0.0
    %783 = vmatpush.msra.mxu0 0.0
    %784 = vmatpush.msra.mxu0 0.0
    %785 = vmatpush.msra.mxu0 0.0
    %786 = vmatpush.msra.mxu0 0.0
    %787 = vmatpush.msra.mxu0 %v155
    %788 = vmatmul.f32.gmra.mxu0 %v101
    %v789 = vpop.f32.mrf.mxu0
    %v790 = vadd.f32 0.0, %v789
    %791 = vmatmul.f32.gmra.mxu0 %v104
    %v792 = vpop.f32.mrf.mxu0
    %v793 = vadd.f32 0.0, %v792
    %794 = vmatmul.f32.gmra.mxu0 %v107
    %v795 = vpop.f32.mrf.mxu0
    %v796 = vadd.f32 0.0, %v795
    %797 = vmatmul.f32.gmra.mxu0 %v110
    %v798 = vpop.f32.mrf.mxu0
    %v799 = vadd.f32 0.0, %v798
    %800 = vmatmul.f32.gmra.mxu0 %v113
    %v801 = vpop.f32.mrf.mxu0
    %v802 = vadd.f32 0.0, %v801
    %803 = vmatmul.f32.gmra.mxu0 %v116
    %v804 = vpop.f32.mrf.mxu0
    %v805 = vadd.f32 0.0, %v804
    %806 = vmatmul.f32.gmra.mxu0 %v119
    %v807 = vpop.f32.mrf.mxu0
    %v808 = vadd.f32 0.0, %v807
    %809 = vmatmul.f32.gmra.mxu0 %v122
    %v810 = vpop.f32.mrf.mxu0
    %v811 = vadd.f32 0.0, %v810
    %812 = vdwg.mxu0
    %v813 = vmul.f32 %v175, 0.1
    %v814 = vmul.f32 %v216, 0.1
    %v815 = vmul.f32 %v257, 0.1
    %v816 = vmul.f32 %v298, 0.1
    %v817 = vmul.f32 %v339, 0.1
    %v818 = vmul.f32 %v380, 0.1
    %v819 = vmul.f32 %v421, 0.1
    %v820 = vmul.f32 %v462, 0.1
    %v821 = vmul.f32 %v503, 0.1
    %v822 = vmul.f32 %v544, 0.1
    %v823 = vmul.f32 %v585, 0.1
    %v824 = vmul.f32 %v626, 0.1
    %v825 = vmul.f32 %v667, 0.1
    %v826 = vmul.f32 %v708, 0.1
    %v827 = vmul.f32 %v749, 0.1
    %v828 = vmul.f32 %v790, 0.1
    %v829 = vmul.f32 %v178, 0.1
    %v830 = vmul.f32 %v219, 0.1
    %v831 = vmul.f32 %v260, 0.1
    %v832 = vmul.f32 %v301, 0.1
    %v833 = vmul.f32 %v342, 0.1
    %v834 = vmul.f32 %v383, 0.1
    %v835 = vmul.f32 %v424, 0.1
    %v836 = vmul.f32 %v465, 0.1
    %v837 = vmul.f32 %v506, 0.1
    %v838 = vmul.f32 %v547, 0.1
    %v839 = vmul.f32 %v588, 0.1
    %v840 = vmul.f32 %v629, 0.1
    %v841 = vmul.f32 %v670, 0.1
    %v842 = vmul.f32 %v711, 0.1
    %v843 = vmul.f32 %v752, 0.1
    %v844 = vmul.f32 %v793, 0.1
    %v845 = vmul.f32 %v181, 0.1
    %v846 = vmul.f32 %v222, 0.1
    %v847 = vmul.f32 %v263, 0.1
    %v848 = vmul.f32 %v304, 0.1
    %v849 = vmul.f32 %v345, 0.1
    %v850 = vmul.f32 %v386, 0.1
    %v851 = vmul.f32 %v427, 0.1
    %v852 = vmul.f32 %v468, 0.1
    %v853 = vmul.f32 %v509, 0.1
    %v854 = vmul.f32 %v550, 0.1
    %v855 = vmul.f32 %v591, 0.1
    %v856 = vmul.f32 %v632, 0.1
    %v857 = vmul.f32 %v673, 0.1
    %v858 = vmul.f32 %v714, 0.1
    %v859 = vmul.f32 %v755, 0.1
    %v860 = vmul.f32 %v796, 0.1
    %v861 = vmul.f32 %v184, 0.1
    %v862 = vmul.f32 %v225, 0.1
    %v863 = vmul.f32 %v266, 0.1
    %v864 = vmul.f32 %v307, 0.1
    %v865 = vmul.f32 %v348, 0.1
    %v866 = vmul.f32 %v389, 0.1
    %v867 = vmul.f32 %v430, 0.1
    %v868 = vmul.f32 %v471, 0.1
    %v869 = vmul.f32 %v512, 0.1
    %v870 = vmul.f32 %v553, 0.1
    %v871 = vmul.f32 %v594, 0.1
    %v872 = vmul.f32 %v635, 0.1
    %v873 = vmul.f32 %v676, 0.1
    %v874 = vmul.f32 %v717, 0.1
    %v875 = vmul.f32 %v758, 0.1
    %v876 = vmul.f32 %v799, 0.1
    %v877 = vmul.f32 %v187, 0.1
    %v878 = vmul.f32 %v228, 0.1
    %v879 = vmul.f32 %v269, 0.1
    %v880 = vmul.f32 %v310, 0.1
    %v881 = vmul.f32 %v351, 0.1
    %v882 = vmul.f32 %v392, 0.1
    %v883 = vmul.f32 %v433, 0.1
    %v884 = vmul.f32 %v474, 0.1
    %v885 = vmul.f32 %v515, 0.1
    %v886 = vmul.f32 %v556, 0.1
    %v887 = vmul.f32 %v597, 0.1
    %v888 = vmul.f32 %v638, 0.1
    %v889 = vmul.f32 %v679, 0.1
    %v890 = vmul.f32 %v720, 0.1
    %v891 = vmul.f32 %v761, 0.1
    %v892 = vmul.f32 %v802, 0.1
    %v893 = vmul.f32 %v190, 0.1
    %v894 = vmul.f32 %v231, 0.1
    %v895 = vmul.f32 %v272, 0.1
    %v896 = vmul.f32 %v313, 0.1
    %v897 = vmul.f32 %v354, 0.1
    %v898 = vmul.f32 %v395, 0.1
    %v899 = vmul.f32 %v436, 0.1
    %v900 = vmul.f32 %v477, 0.1
    %v901 = vmul.f32 %v518, 0.1
    %v902 = vmul.f32 %v559, 0.1
    %v903 = vmul.f32 %v600, 0.1
    %v904 = vmul.f32 %v641, 0.1
    %v905 = vmul.f32 %v682, 0.1
    %v906 = vmul.f32 %v723, 0.1
    %v907 = vmul.f32 %v764, 0.1
    %v908 = vmul.f32 %v805, 0.1
    %v909 = vmul.f32 %v193, 0.1
    %v910 = vmul.f32 %v234, 0.1
    %v911 = vmul.f32 %v275, 0.1
    %v912 = vmul.f32 %v316, 0.1
    %v913 = vmul.f32 %v357, 0.1
    %v914 = vmul.f32 %v398, 0.1
    %v915 = vmul.f32 %v439, 0.1
    %v916 = vmul.f32 %v480, 0.1
    %v917 = vmul.f32 %v521, 0.1
    %v918 = vmul.f32 %v562, 0.1
    %v919 = vmul.f32 %v603, 0.1
    %v920 = vmul.f32 %v644, 0.1
    %v921 = vmul.f32 %v685, 0.1
    %v922 = vmul.f32 %v726, 0.1
    %v923 = vmul.f32 %v767, 0.1
    %v924 = vmul.f32 %v808, 0.1
    %v925 = vmul.f32 %v196, 0.1
    %v926 = vmul.f32 %v237, 0.1
    %v927 = vmul.f32 %v278, 0.1
    %v928 = vmul.f32 %v319, 0.1
    %v929 = vmul.f32 %v360, 0.1
    %v930 = vmul.f32 %v401, 0.1
    %v931 = vmul.f32 %v442, 0.1
    %v932 = vmul.f32 %v483, 0.1
    %v933 = vmul.f32 %v524, 0.1
    %v934 = vmul.f32 %v565, 0.1
    %v935 = vmul.f32 %v606, 0.1
    %v936 = vmul.f32 %v647, 0.1
    %v937 = vmul.f32 %v688, 0.1
    %v938 = vmul.f32 %v729, 0.1
    %v939 = vmul.f32 %v770, 0.1
    %v940 = vmul.f32 %v811, 0.1
    %v941 = vmax.f32 %v175, %v813
    %v942 = vmax.f32 %v216, %v814
    %v943 = vmax.f32 %v257, %v815
    %v944 = vmax.f32 %v298, %v816
    %v945 = vmax.f32 %v339, %v817
    %v946 = vmax.f32 %v380, %v818
    %v947 = vmax.f32 %v421, %v819
    %v948 = vmax.f32 %v462, %v820
    %v949 = vmax.f32 %v503, %v821
    %v950 = vmax.f32 %v544, %v822
    %v951 = vmax.f32 %v585, %v823
    %v952 = vmax.f32 %v626, %v824
    %v953 = vmax.f32 %v667, %v825
    %v954 = vmax.f32 %v708, %v826
    %v955 = vmax.f32 %v749, %v827
    %v956 = vmax.f32 %v790, %v828
    %v957 = vmax.f32 %v178, %v829
    %v958 = vmax.f32 %v219, %v830
    %v959 = vmax.f32 %v260, %v831
    %v960 = vmax.f32 %v301, %v832
    %v961 = vmax.f32 %v342, %v833
    %v962 = vmax.f32 %v383, %v834
    %v963 = vmax.f32 %v424, %v835
    %v964 = vmax.f32 %v465, %v836
    %v965 = vmax.f32 %v506, %v837
    %v966 = vmax.f32 %v547, %v838
    %v967 = vmax.f32 %v588, %v839
    %v968 = vmax.f32 %v629, %v840
    %v969 = vmax.f32 %v670, %v841
    %v970 = vmax.f32 %v711, %v842
    %v971 = vmax.f32 %v752, %v843
    %v972 = vmax.f32 %v793, %v844
    %v973 = vmax.f32 %v181, %v845
    %v974 = vmax.f32 %v222, %v846
    %v975 = vmax.f32 %v263, %v847
    %v976 = vmax.f32 %v304, %v848
    %v977 = vmax.f32 %v345, %v849
    %v978 = vmax.f32 %v386, %v850
    %v979 = vmax.f32 %v427, %v851
    %v980 = vmax.f32 %v468, %v852
    %v981 = vmax.f32 %v509, %v853
    %v982 = vmax.f32 %v550, %v854
    %v983 = vmax.f32 %v591, %v855
    %v984 = vmax.f32 %v632, %v856
    %v985 = vmax.f32 %v673, %v857
    %v986 = vmax.f32 %v714, %v858
    %v987 = vmax.f32 %v755, %v859
    %v988 = vmax.f32 %v796, %v860
    %v989 = vmax.f32 %v184, %v861
    %v990 = vmax.f32 %v225, %v862
    %v991 = vmax.f32 %v266, %v863
    %v992 = vmax.f32 %v307, %v864
    %v993 = vmax.f32 %v348, %v865
    %v994 = vmax.f32 %v389, %v866
    %v995 = vmax.f32 %v430, %v867
    %v996 = vmax.f32 %v471, %v868
    %v997 = vmax.f32 %v512, %v869
    %v998 = vmax.f32 %v553, %v870
    %v999 = vmax.f32 %v594, %v871
    %v1000 = vmax.f32 %v635, %v872
    %v1001 = vmax.f32 %v676, %v873
    %v1002 = vmax.f32 %v717, %v874
    %v1003 = vmax.f32 %v758, %v875
    %v1004 = vmax.f32 %v799, %v876
    %v1005 = vmax.f32 %v187, %v877
    %v1006 = vmax.f32 %v228, %v878
    %v1007 = vmax.f32 %v269, %v879
    %v1008 = vmax.f32 %v310, %v880
    %v1009 = vmax.f32 %v351, %v881
    %v1010 = vmax.f32 %v392, %v882
    %v1011 = vmax.f32 %v433, %v883
    %v1012 = vmax.f32 %v474, %v884
    %v1013 = vmax.f32 %v515, %v885
    %v1014 = vmax.f32 %v556, %v886
    %v1015 = vmax.f32 %v597, %v887
    %v1016 = vmax.f32 %v638, %v888
    %v1017 = vmax.f32 %v679, %v889
    %v1018 = vmax.f32 %v720, %v890
    %v1019 = vmax.f32 %v761, %v891
    %v1020 = vmax.f32 %v802, %v892
    %v1021 = vmax.f32 %v190, %v893
    %v1022 = vmax.f32 %v231, %v894
    %v1023 = vmax.f32 %v272, %v895
    %v1024 = vmax.f32 %v313, %v896
    %v1025 = vmax.f32 %v354, %v897
    %v1026 = vmax.f32 %v395, %v898
    %v1027 = vmax.f32 %v436, %v899
    %v1028 = vmax.f32 %v477, %v900
    %v1029 = vmax.f32 %v518, %v901
    %v1030 = vmax.f32 %v559, %v902
    %v1031 = vmax.f32 %v600, %v903
    %v1032 = vmax.f32 %v641, %v904
    %v1033 = vmax.f32 %v682, %v905
    %v1034 = vmax.f32 %v723, %v906
    %v1035 = vmax.f32 %v764, %v907
    %v1036 = vmax.f32 %v805, %v908
    %v1037 = vmax.f32 %v193, %v909
    %v1038 = vmax.f32 %v234, %v910
    %v1039 = vmax.f32 %v275, %v911
    %v1040 = vmax.f32 %v316, %v912
    %v1041 = vmax.f32 %v357, %v913
    %v1042 = vmax.f32 %v398, %v914
    %v1043 = vmax.f32 %v439, %v915
    %v1044 = vmax.f32 %v480, %v916
    %v1045 = vmax.f32 %v521, %v917
    %v1046 = vmax.f32 %v562, %v918
    %v1047 = vmax.f32 %v603, %v919
    %v1048 = vmax.f32 %v644, %v920
    %v1049 = vmax.f32 %v685, %v921
    %v1050 = vmax.f32 %v726, %v922
    %v1051 = vmax.f32 %v767, %v923
    %v1052 = vmax.f32 %v808, %v924
    %v1053 = vmax.f32 %v196, %v925
    %v1054 = vmax.f32 %v237, %v926
    %v1055 = vmax.f32 %v278, %v927
    %v1056 = vmax.f32 %v319, %v928
    %v1057 = vmax.f32 %v360, %v929
    %v1058 = vmax.f32 %v401, %v930
    %v1059 = vmax.f32 %v442, %v931
    %v1060 = vmax.f32 %v483, %v932
    %v1061 = vmax.f32 %v524, %v933
    %v1062 = vmax.f32 %v565, %v934
    %v1063 = vmax.f32 %v606, %v935
    %v1064 = vmax.f32 %v647, %v936
    %v1065 = vmax.f32 %v688, %v937
    %v1066 = vmax.f32 %v729, %v938
    %v1067 = vmax.f32 %v770, %v939
    %v1068 = vmax.f32 %v811, %v940
    %vm1069 = vcmask 523264
    %v1071 = vsel %vm1069, %v34, 0
    %v1074 = vsel %vm1069, %v35, 0
    %v1077 = vsel %vm1069, %v36, 0
    %v1080 = vsel %vm1069, %v37, 0
    %1082 = vmatpush.msra.mxu0 0.0
    %1083 = vmatpush.msra.mxu0 0.0
    %1084 = vmatpush.msra.mxu0 0.0
    %1085 = vmatpush.msra.mxu0 0.0
    %1086 = vmatpush.msra.mxu0 0.0
    %1087 = vmatpush.msra.mxu0 0.0
    %1088 = vmatpush.msra.mxu0 0.0
    %1089 = vmatpush.msra.mxu0 0.0
    %1090 = vmatpush.msra.mxu0 %v1053
    %1091 = vmatpush.msra.mxu0 %v1037
    %1092 = vmatpush.msra.mxu0 %v1021
    %1093 = vmatpush.msra.mxu0 %v1005
    %1094 = vmatpush.msra.mxu0 %v989
    %1095 = vmatpush.msra.mxu0 %v973
    %1096 = vmatpush.msra.mxu0 %v957
    %1097 = vmatpush.msra.mxu0 %v941
    %1098 = vmatmul.f32.gmra.mxu0 %v1071
    %v1099 = vpop.f32.mrf.mxu0
    %v1100 = vadd.f32 %v46, %v1099
    %1101 = vmatmul.f32.gmra.mxu0 %v1074
    %v1102 = vpop.f32.mrf.mxu0
    %v1103 = vadd.f32 %v51, %v1102
    %1104 = vmatmul.f32.gmra.mxu0 %v1077
    %v1105 = vpop.f32.mrf.mxu0
    %v1106 = vadd.f32 %v56, %v1105
    %1107 = vmatmul.f32.gmra.mxu0 %v1080
    %v1108 = vpop.f32.mrf.mxu0
    %v1109 = vadd.f32 %v61, %v1108
    %1110 = vdwg.mxu0
    %1111 = vmatpush.msra.mxu0 0.0
    %1112 = vmatpush.msra.mxu0 0.0
    %1113 = vmatpush.msra.mxu0 0.0
    %1114 = vmatpush.msra.mxu0 0.0
    %1115 = vmatpush.msra.mxu0 0.0
    %1116 = vmatpush.msra.mxu0 0.0
    %1117 = vmatpush.msra.mxu0 0.0
    %1118 = vmatpush.msra.mxu0 0.0
    %1119 = vmatpush.msra.mxu0 %v1054
    %1120 = vmatpush.msra.mxu0 %v1038
    %1121 = vmatpush.msra.mxu0 %v1022
    %1122 = vmatpush.msra.mxu0 %v1006
    %1123 = vmatpush.msra.mxu0 %v990
    %1124 = vmatpush.msra.mxu0 %v974
    %1125 = vmatpush.msra.mxu0 %v958
    %1126 = vmatpush.msra.mxu0 %v942
    %1127 = vmatmul.f32.gmra.mxu0 %v1071
    %v1128 = vpop.f32.mrf.mxu0
    %v1129 = vadd.f32 %v46, %v1128
    %1130 = vmatmul.f32.gmra.mxu0 %v1074
    %v1131 = vpop.f32.mrf.mxu0
    %v1132 = vadd.f32 %v51, %v1131
    %1133 = vmatmul.f32.gmra.mxu0 %v1077
    %v1134 = vpop.f32.mrf.mxu0
    %v1135 = vadd.f32 %v56, %v1134
    %1136 = vmatmul.f32.gmra.mxu0 %v1080
    %v1137 = vpop.f32.mrf.mxu0
    %v1138 = vadd.f32 %v61, %v1137
    %1139 = vdwg.mxu0
    %1140 = vmatpush.msra.mxu0 0.0
    %1141 = vmatpush.msra.mxu0 0.0
    %1142 = vmatpush.msra.mxu0 0.0
    %1143 = vmatpush.msra.mxu0 0.0
    %1144 = vmatpush.msra.mxu0 0.0
    %1145 = vmatpush.msra.mxu0 0.0
    %1146 = vmatpush.msra.mxu0 0.0
    %1147 = vmatpush.msra.mxu0 0.0
    %1148 = vmatpush.msra.mxu0 %v1055
    %1149 = vmatpush.msra.mxu0 %v1039
    %1150 = vmatpush.msra.mxu0 %v1023
    %1151 = vmatpush.msra.mxu0 %v1007
    %1152 = vmatpush.msra.mxu0 %v991
    %1153 = vmatpush.msra.mxu0 %v975
    %1154 = vmatpush.msra.mxu0 %v959
    %1155 = vmatpush.msra.mxu0 %v943
    %1156 = vmatmul.f32.gmra.mxu0 %v1071
    %v1157 = vpop.f32.mrf.mxu0
    %v1158 = vadd.f32 %v46, %v1157
    %1159 = vmatmul.f32.gmra.mxu0 %v1074
    %v1160 = vpop.f32.mrf.mxu0
    %v1161 = vadd.f32 %v51, %v1160
    %1162 = vmatmul.f32.gmra.mxu0 %v1077
    %v1163 = vpop.f32.mrf.mxu0
    %v1164 = vadd.f32 %v56, %v1163
    %1165 = vmatmul.f32.gmra.mxu0 %v1080
    %v1166 = vpop.f32.mrf.mxu0
    %v1167 = vadd.f32 %v61, %v1166
    %1168 = vdwg.mxu0
    %1169 = vmatpush.msra.mxu0 0.0
    %1170 = vmatpush.msra.mxu0 0.0
    %1171 = vmatpush.msra.mxu0 0.0
    %1172 = vmatpush.msra.mxu0 0.0
    %1173 = vmatpush.msra.mxu0 0.0
    %1174 = vmatpush.msra.mxu0 0.0
    %1175 = vmatpush.msra.mxu0 0.0
    %1176 = vmatpush.msra.mxu0 0.0
    %1177 = vmatpush.msra.mxu0 %v1056
    %1178 = vmatpush.msra.mxu0 %v1040
    %1179 = vmatpush.msra.mxu0 %v1024
    %1180 = vmatpush.msra.mxu0 %v1008
    %1181 = vmatpush.msra.mxu0 %v992
    %1182 = vmatpush.msra.mxu0 %v976
    %1183 = vmatpush.msra.mxu0 %v960
    %1184 = vmatpush.msra.mxu0 %v944
    %1185 = vmatmul.f32.gmra.mxu0 %v1071
    %v1186 = vpop.f32.mrf.mxu0
    %v1187 = vadd.f32 %v46, %v1186
    %1188 = vmatmul.f32.gmra.mxu0 %v1074
    %v1189 = vpop.f32.mrf.mxu0
    %v1190 = vadd.f32 %v51, %v1189
    %1191 = vmatmul.f32.gmra.mxu0 %v1077
    %v1192 = vpop.f32.mrf.mxu0
    %v1193 = vadd.f32 %v56, %v1192
    %1194 = vmatmul.f32.gmra.mxu0 %v1080
    %v1195 = vpop.f32.mrf.mxu0
    %v1196 = vadd.f32 %v61, %v1195
    %1197 = vdwg.mxu0
    %1198 = vmatpush.msra.mxu0 0.0
    %1199 = vmatpush.msra.mxu0 0.0
    %1200 = vmatpush.msra.mxu0 0.0
    %1201 = vmatpush.msra.mxu0 0.0
    %1202 = vmatpush.msra.mxu0 0.0
    %1203 = vmatpush.msra.mxu0 0.0
    %1204 = vmatpush.msra.mxu0 0.0
    %1205 = vmatpush.msra.mxu0 0.0
    %1206 = vmatpush.msra.mxu0 %v1057
    %1207 = vmatpush.msra.mxu0 %v1041
    %1208 = vmatpush.msra.mxu0 %v1025
    %1209 = vmatpush.msra.mxu0 %v1009
    %1210 = vmatpush.msra.mxu0 %v993
    %1211 = vmatpush.msra.mxu0 %v977
    %1212 = vmatpush.msra.mxu0 %v961
    %1213 = vmatpush.msra.mxu0 %v945
    %1214 = vmatmul.f32.gmra.mxu0 %v1071
    %v1215 = vpop.f32.mrf.mxu0
    %v1216 = vadd.f32 %v46, %v1215
    %1217 = vmatmul.f32.gmra.mxu0 %v1074
    %v1218 = vpop.f32.mrf.mxu0
    %v1219 = vadd.f32 %v51, %v1218
    %1220 = vmatmul.f32.gmra.mxu0 %v1077
    %v1221 = vpop.f32.mrf.mxu0
    %v1222 = vadd.f32 %v56, %v1221
    %1223 = vmatmul.f32.gmra.mxu0 %v1080
    %v1224 = vpop.f32.mrf.mxu0
    %v1225 = vadd.f32 %v61, %v1224
    %1226 = vdwg.mxu0
    %1227 = vmatpush.msra.mxu0 0.0
    %1228 = vmatpush.msra.mxu0 0.0
    %1229 = vmatpush.msra.mxu0 0.0
    %1230 = vmatpush.msra.mxu0 0.0
    %1231 = vmatpush.msra.mxu0 0.0
    %1232 = vmatpush.msra.mxu0 0.0
    %1233 = vmatpush.msra.mxu0 0.0
    %1234 = vmatpush.msra.mxu0 0.0
    %1235 = vmatpush.msra.mxu0 %v1058
    %1236 = vmatpush.msra.mxu0 %v1042
    %1237 = vmatpush.msra.mxu0 %v1026
    %1238 = vmatpush.msra.mxu0 %v1010
    %1239 = vmatpush.msra.mxu0 %v994
    %1240 = vmatpush.msra.mxu0 %v978
    %1241 = vmatpush.msra.mxu0 %v962
    %1242 = vmatpush.msra.mxu0 %v946
    %1243 = vmatmul.f32.gmra.mxu0 %v1071
    %v1244 = vpop.f32.mrf.mxu0
    %v1245 = vadd.f32 %v46, %v1244
    %1246 = vmatmul.f32.gmra.mxu0 %v1074
    %v1247 = vpop.f32.mrf.mxu0
    %v1248 = vadd.f32 %v51, %v1247
    %1249 = vmatmul.f32.gmra.mxu0 %v1077
    %v1250 = vpop.f32.mrf.mxu0
    %v1251 = vadd.f32 %v56, %v1250
    %1252 = vmatmul.f32.gmra.mxu0 %v1080
    %v1253 = vpop.f32.mrf.mxu0
    %v1254 = vadd.f32 %v61, %v1253
    %1255 = vdwg.mxu0
    %1256 = vmatpush.msra.mxu0 0.0
    %1257 = vmatpush.msra.mxu0 0.0
    %1258 = vmatpush.msra.mxu0 0.0
    %1259 = vmatpush.msra.mxu0 0.0
    %1260 = vmatpush.msra.mxu0 0.0
    %1261 = vmatpush.msra.mxu0 0.0
    %1262 = vmatpush.msra.mxu0 0.0
    %1263 = vmatpush.msra.mxu0 0.0
    %1264 = vmatpush.msra.mxu0 %v1059
    %1265 = vmatpush.msra.mxu0 %v1043
    %1266 = vmatpush.msra.mxu0 %v1027
    %1267 = vmatpush.msra.mxu0 %v1011
    %1268 = vmatpush.msra.mxu0 %v995
    %1269 = vmatpush.msra.mxu0 %v979
    %1270 = vmatpush.msra.mxu0 %v963
    %1271 = vmatpush.msra.mxu0 %v947
    %1272 = vmatmul.f32.gmra.mxu0 %v1071
    %v1273 = vpop.f32.mrf.mxu0
    %v1274 = vadd.f32 %v46, %v1273
    %1275 = vmatmul.f32.gmra.mxu0 %v1074
    %v1276 = vpop.f32.mrf.mxu0
    %v1277 = vadd.f32 %v51, %v1276
    %1278 = vmatmul.f32.gmra.mxu0 %v1077
    %v1279 = vpop.f32.mrf.mxu0
    %v1280 = vadd.f32 %v56, %v1279
    %1281 = vmatmul.f32.gmra.mxu0 %v1080
    %v1282 = vpop.f32.mrf.mxu0
    %v1283 = vadd.f32 %v61, %v1282
    %1284 = vdwg.mxu0
    %1285 = vmatpush.msra.mxu0 0.0
    %1286 = vmatpush.msra.mxu0 0.0
    %1287 = vmatpush.msra.mxu0 0.0
    %1288 = vmatpush.msra.mxu0 0.0
    %1289 = vmatpush.msra.mxu0 0.0
    %1290 = vmatpush.msra.mxu0 0.0
    %1291 = vmatpush.msra.mxu0 0.0
    %1292 = vmatpush.msra.mxu0 0.0
    %1293 = vmatpush.msra.mxu0 %v1060
    %1294 = vmatpush.msra.mxu0 %v1044
    %1295 = vmatpush.msra.mxu0 %v1028
    %1296 = vmatpush.msra.mxu0 %v1012
    %1297 = vmatpush.msra.mxu0 %v996
    %1298 = vmatpush.msra.mxu0 %v980
    %1299 = vmatpush.msra.mxu0 %v964
    %1300 = vmatpush.msra.mxu0 %v948
    %1301 = vmatmul.f32.gmra.mxu0 %v1071
    %v1302 = vpop.f32.mrf.mxu0
    %v1303 = vadd.f32 %v46, %v1302
    %1304 = vmatmul.f32.gmra.mxu0 %v1074
    %v1305 = vpop.f32.mrf.mxu0
    %v1306 = vadd.f32 %v51, %v1305
    %1307 = vmatmul.f32.gmra.mxu0 %v1077
    %v1308 = vpop.f32.mrf.mxu0
    %v1309 = vadd.f32 %v56, %v1308
    %1310 = vmatmul.f32.gmra.mxu0 %v1080
    %v1311 = vpop.f32.mrf.mxu0
    %v1312 = vadd.f32 %v61, %v1311
    %1313 = vdwg.mxu0
    %1314 = vmatpush.msra.mxu0 0.0
    %1315 = vmatpush.msra.mxu0 0.0
    %1316 = vmatpush.msra.mxu0 0.0
    %1317 = vmatpush.msra.mxu0 0.0
    %1318 = vmatpush.msra.mxu0 0.0
    %1319 = vmatpush.msra.mxu0 0.0
    %1320 = vmatpush.msra.mxu0 0.0
    %1321 = vmatpush.msra.mxu0 0.0
    %1322 = vmatpush.msra.mxu0 %v1061
    %1323 = vmatpush.msra.mxu0 %v1045
    %1324 = vmatpush.msra.mxu0 %v1029
    %1325 = vmatpush.msra.mxu0 %v1013
    %1326 = vmatpush.msra.mxu0 %v997
    %1327 = vmatpush.msra.mxu0 %v981
    %1328 = vmatpush.msra.mxu0 %v965
    %1329 = vmatpush.msra.mxu0 %v949
    %1330 = vmatmul.f32.gmra.mxu0 %v1071
    %v1331 = vpop.f32.mrf.mxu0
    %v1332 = vadd.f32 %v46, %v1331
    %1333 = vmatmul.f32.gmra.mxu0 %v1074
    %v1334 = vpop.f32.mrf.mxu0
    %v1335 = vadd.f32 %v51, %v1334
    %1336 = vmatmul.f32.gmra.mxu0 %v1077
    %v1337 = vpop.f32.mrf.mxu0
    %v1338 = vadd.f32 %v56, %v1337
    %1339 = vmatmul.f32.gmra.mxu0 %v1080
    %v1340 = vpop.f32.mrf.mxu0
    %v1341 = vadd.f32 %v61, %v1340
    %1342 = vdwg.mxu0
    %1343 = vmatpush.msra.mxu0 0.0
    %1344 = vmatpush.msra.mxu0 0.0
    %1345 = vmatpush.msra.mxu0 0.0
    %1346 = vmatpush.msra.mxu0 0.0
    %1347 = vmatpush.msra.mxu0 0.0
    %1348 = vmatpush.msra.mxu0 0.0
    %1349 = vmatpush.msra.mxu0 0.0
    %1350 = vmatpush.msra.mxu0 0.0
    %1351 = vmatpush.msra.mxu0 %v1062
    %1352 = vmatpush.msra.mxu0 %v1046
    %1353 = vmatpush.msra.mxu0 %v1030
    %1354 = vmatpush.msra.mxu0 %v1014
    %1355 = vmatpush.msra.mxu0 %v998
    %1356 = vmatpush.msra.mxu0 %v982
    %1357 = vmatpush.msra.mxu0 %v966
    %1358 = vmatpush.msra.mxu0 %v950
    %1359 = vmatmul.f32.gmra.mxu0 %v1071
    %v1360 = vpop.f32.mrf.mxu0
    %v1361 = vadd.f32 %v46, %v1360
    %1362 = vmatmul.f32.gmra.mxu0 %v1074
    %v1363 = vpop.f32.mrf.mxu0
    %v1364 = vadd.f32 %v51, %v1363
    %1365 = vmatmul.f32.gmra.mxu0 %v1077
    %v1366 = vpop.f32.mrf.mxu0
    %v1367 = vadd.f32 %v56, %v1366
    %1368 = vmatmul.f32.gmra.mxu0 %v1080
    %v1369 = vpop.f32.mrf.mxu0
    %v1370 = vadd.f32 %v61, %v1369
    %1371 = vdwg.mxu0
    %1372 = vmatpush.msra.mxu0 0.0
    %1373 = vmatpush.msra.mxu0 0.0
    %1374 = vmatpush.msra.mxu0 0.0
    %1375 = vmatpush.msra.mxu0 0.0
    %1376 = vmatpush.msra.mxu0 0.0
    %1377 = vmatpush.msra.mxu0 0.0
    %1378 = vmatpush.msra.mxu0 0.0
    %1379 = vmatpush.msra.mxu0 0.0
    %1380 = vmatpush.msra.mxu0 %v1063
    %1381 = vmatpush.msra.mxu0 %v1047
    %1382 = vmatpush.msra.mxu0 %v1031
    %1383 = vmatpush.msra.mxu0 %v1015
    %1384 = vmatpush.msra.mxu0 %v999
    %1385 = vmatpush.msra.mxu0 %v983
    %1386 = vmatpush.msra.mxu0 %v967
    %1387 = vmatpush.msra.mxu0 %v951
    %1388 = vmatmul.f32.gmra.mxu0 %v1071
    %v1389 = vpop.f32.mrf.mxu0
    %v1390 = vadd.f32 %v46, %v1389
    %1391 = vmatmul.f32.gmra.mxu0 %v1074
    %v1392 = vpop.f32.mrf.mxu0
    %v1393 = vadd.f32 %v51, %v1392
    %1394 = vmatmul.f32.gmra.mxu0 %v1077
    %v1395 = vpop.f32.mrf.mxu0
    %v1396 = vadd.f32 %v56, %v1395
    %1397 = vmatmul.f32.gmra.mxu0 %v1080
    %v1398 = vpop.f32.mrf.mxu0
    %v1399 = vadd.f32 %v61, %v1398
    %1400 = vdwg.mxu0
    %1401 = vmatpush.msra.mxu0 0.0
    %1402 = vmatpush.msra.mxu0 0.0
    %1403 = vmatpush.msra.mxu0 0.0
    %1404 = vmatpush.msra.mxu0 0.0
    %1405 = vmatpush.msra.mxu0 0.0
    %1406 = vmatpush.msra.mxu0 0.0
    %1407 = vmatpush.msra.mxu0 0.0
    %1408 = vmatpush.msra.mxu0 0.0
    %1409 = vmatpush.msra.mxu0 %v1064
    %1410 = vmatpush.msra.mxu0 %v1048
    %1411 = vmatpush.msra.mxu0 %v1032
    %1412 = vmatpush.msra.mxu0 %v1016
    %1413 = vmatpush.msra.mxu0 %v1000
    %1414 = vmatpush.msra.mxu0 %v984
    %1415 = vmatpush.msra.mxu0 %v968
    %1416 = vmatpush.msra.mxu0 %v952
    %1417 = vmatmul.f32.gmra.mxu0 %v1071
    %v1418 = vpop.f32.mrf.mxu0
    %v1419 = vadd.f32 %v46, %v1418
    %1420 = vmatmul.f32.gmra.mxu0 %v1074
    %v1421 = vpop.f32.mrf.mxu0
    %v1422 = vadd.f32 %v51, %v1421
    %1423 = vmatmul.f32.gmra.mxu0 %v1077
    %v1424 = vpop.f32.mrf.mxu0
    %v1425 = vadd.f32 %v56, %v1424
    %1426 = vmatmul.f32.gmra.mxu0 %v1080
    %v1427 = vpop.f32.mrf.mxu0
    %v1428 = vadd.f32 %v61, %v1427
    %1429 = vdwg.mxu0
    %1430 = vmatpush.msra.mxu0 0.0
    %1431 = vmatpush.msra.mxu0 0.0
    %1432 = vmatpush.msra.mxu0 0.0
    %1433 = vmatpush.msra.mxu0 0.0
    %1434 = vmatpush.msra.mxu0 0.0
    %1435 = vmatpush.msra.mxu0 0.0
    %1436 = vmatpush.msra.mxu0 0.0
    %1437 = vmatpush.msra.mxu0 0.0
    %1438 = vmatpush.msra.mxu0 %v1065
    %1439 = vmatpush.msra.mxu0 %v1049
    %1440 = vmatpush.msra.mxu0 %v1033
    %1441 = vmatpush.msra.mxu0 %v1017
    %1442 = vmatpush.msra.mxu0 %v1001
    %1443 = vmatpush.msra.mxu0 %v985
    %1444 = vmatpush.msra.mxu0 %v969
    %1445 = vmatpush.msra.mxu0 %v953
    %1446 = vmatmul.f32.gmra.mxu0 %v1071
    %v1447 = vpop.f32.mrf.mxu0
    %v1448 = vadd.f32 %v46, %v1447
    %1449 = vmatmul.f32.gmra.mxu0 %v1074
    %v1450 = vpop.f32.mrf.mxu0
    %v1451 = vadd.f32 %v51, %v1450
    %1452 = vmatmul.f32.gmra.mxu0 %v1077
    %v1453 = vpop.f32.mrf.mxu0
    %v1454 = vadd.f32 %v56, %v1453
    %1455 = vmatmul.f32.gmra.mxu0 %v1080
    %v1456 = vpop.f32.mrf.mxu0
    %v1457 = vadd.f32 %v61, %v1456
    %1458 = vdwg.mxu0
    %1459 = vmatpush.msra.mxu0 0.0
    %1460 = vmatpush.msra.mxu0 0.0
    %1461 = vmatpush.msra.mxu0 0.0
    %1462 = vmatpush.msra.mxu0 0.0
    %1463 = vmatpush.msra.mxu0 0.0
    %1464 = vmatpush.msra.mxu0 0.0
    %1465 = vmatpush.msra.mxu0 0.0
    %1466 = vmatpush.msra.mxu0 0.0
    %1467 = vmatpush.msra.mxu0 %v1066
    %1468 = vmatpush.msra.mxu0 %v1050
    %1469 = vmatpush.msra.mxu0 %v1034
    %1470 = vmatpush.msra.mxu0 %v1018
    %1471 = vmatpush.msra.mxu0 %v1002
    %1472 = vmatpush.msra.mxu0 %v986
    %1473 = vmatpush.msra.mxu0 %v970
    %1474 = vmatpush.msra.mxu0 %v954
    %1475 = vmatmul.f32.gmra.mxu0 %v1071
    %v1476 = vpop.f32.mrf.mxu0
    %v1477 = vadd.f32 %v46, %v1476
    %1478 = vmatmul.f32.gmra.mxu0 %v1074
    %v1479 = vpop.f32.mrf.mxu0
    %v1480 = vadd.f32 %v51, %v1479
    %1481 = vmatmul.f32.gmra.mxu0 %v1077
    %v1482 = vpop.f32.mrf.mxu0
    %v1483 = vadd.f32 %v56, %v1482
    %1484 = vmatmul.f32.gmra.mxu0 %v1080
    %v1485 = vpop.f32.mrf.mxu0
    %v1486 = vadd.f32 %v61, %v1485
    %1487 = vdwg.mxu0
    %1488 = vmatpush.msra.mxu0 0.0
    %1489 = vmatpush.msra.mxu0 0.0
    %1490 = vmatpush.msra.mxu0 0.0
    %1491 = vmatpush.msra.mxu0 0.0
    %1492 = vmatpush.msra.mxu0 0.0
    %1493 = vmatpush.msra.mxu0 0.0
    %1494 = vmatpush.msra.mxu0 0.0
    %1495 = vmatpush.msra.mxu0 0.0
    %1496 = vmatpush.msra.mxu0 %v1067
    %1497 = vmatpush.msra.mxu0 %v1051
    %1498 = vmatpush.msra.mxu0 %v1035
    %1499 = vmatpush.msra.mxu0 %v1019
    %1500 = vmatpush.msra.mxu0 %v1003
    %1501 = vmatpush.msra.mxu0 %v987
    %1502 = vmatpush.msra.mxu0 %v971
    %1503 = vmatpush.msra.mxu0 %v955
    %1504 = vmatmul.f32.gmra.mxu0 %v1071
    %v1505 = vpop.f32.mrf.mxu0
    %v1506 = vadd.f32 %v46, %v1505
    %1507 = vmatmul.f32.gmra.mxu0 %v1074
    %v1508 = vpop.f32.mrf.mxu0
    %v1509 = vadd.f32 %v51, %v1508
    %1510 = vmatmul.f32.gmra.mxu0 %v1077
    %v1511 = vpop.f32.mrf.mxu0
    %v1512 = vadd.f32 %v56, %v1511
    %1513 = vmatmul.f32.gmra.mxu0 %v1080
    %v1514 = vpop.f32.mrf.mxu0
    %v1515 = vadd.f32 %v61, %v1514
    %1516 = vdwg.mxu0
    %1517 = vmatpush.msra.mxu0 0.0
    %1518 = vmatpush.msra.mxu0 0.0
    %1519 = vmatpush.msra.mxu0 0.0
    %1520 = vmatpush.msra.mxu0 0.0
    %1521 = vmatpush.msra.mxu0 0.0
    %1522 = vmatpush.msra.mxu0 0.0
    %1523 = vmatpush.msra.mxu0 0.0
    %1524 = vmatpush.msra.mxu0 0.0
    %1525 = vmatpush.msra.mxu0 %v1068
    %1526 = vmatpush.msra.mxu0 %v1052
    %1527 = vmatpush.msra.mxu0 %v1036
    %1528 = vmatpush.msra.mxu0 %v1020
    %1529 = vmatpush.msra.mxu0 %v1004
    %1530 = vmatpush.msra.mxu0 %v988
    %1531 = vmatpush.msra.mxu0 %v972
    %1532 = vmatpush.msra.mxu0 %v956
    %1533 = vmatmul.f32.gmra.mxu0 %v1071
    %v1534 = vpop.f32.mrf.mxu0
    %v1535 = vadd.f32 %v46, %v1534
    %1536 = vmatmul.f32.gmra.mxu0 %v1074
    %v1537 = vpop.f32.mrf.mxu0
    %v1538 = vadd.f32 %v51, %v1537
    %1539 = vmatmul.f32.gmra.mxu0 %v1077
    %v1540 = vpop.f32.mrf.mxu0
    %v1541 = vadd.f32 %v56, %v1540
    %1542 = vmatmul.f32.gmra.mxu0 %v1080
    %v1543 = vpop.f32.mrf.mxu0
    %v1544 = vadd.f32 %v61, %v1543
    %1545 = vdwg.mxu0
    %v1546 = vmul.f32 %v1100, 0.1
    %v1547 = vmul.f32 %v1129, 0.1
    %v1548 = vmul.f32 %v1158, 0.1
    %v1549 = vmul.f32 %v1187, 0.1
    %v1550 = vmul.f32 %v1216, 0.1
    %v1551 = vmul.f32 %v1245, 0.1
    %v1552 = vmul.f32 %v1274, 0.1
    %v1553 = vmul.f32 %v1303, 0.1
    %v1554 = vmul.f32 %v1332, 0.1
    %v1555 = vmul.f32 %v1361, 0.1
    %v1556 = vmul.f32 %v1390, 0.1
    %v1557 = vmul.f32 %v1419, 0.1
    %v1558 = vmul.f32 %v1448, 0.1
    %v1559 = vmul.f32 %v1477, 0.1
    %v1560 = vmul.f32 %v1506, 0.1
    %v1561 = vmul.f32 %v1535, 0.1
    %v1562 = vmul.f32 %v1103, 0.1
    %v1563 = vmul.f32 %v1132, 0.1
    %v1564 = vmul.f32 %v1161, 0.1
    %v1565 = vmul.f32 %v1190, 0.1
    %v1566 = vmul.f32 %v1219, 0.1
    %v1567 = vmul.f32 %v1248, 0.1
    %v1568 = vmul.f32 %v1277, 0.1
    %v1569 = vmul.f32 %v1306, 0.1
    %v1570 = vmul.f32 %v1335, 0.1
    %v1571 = vmul.f32 %v1364, 0.1
    %v1572 = vmul.f32 %v1393, 0.1
    %v1573 = vmul.f32 %v1422, 0.1
    %v1574 = vmul.f32 %v1451, 0.1
    %v1575 = vmul.f32 %v1480, 0.1
    %v1576 = vmul.f32 %v1509, 0.1
    %v1577 = vmul.f32 %v1538, 0.1
    %v1578 = vmul.f32 %v1106, 0.1
    %v1579 = vmul.f32 %v1135, 0.1
    %v1580 = vmul.f32 %v1164, 0.1
    %v1581 = vmul.f32 %v1193, 0.1
    %v1582 = vmul.f32 %v1222, 0.1
    %v1583 = vmul.f32 %v1251, 0.1
    %v1584 = vmul.f32 %v1280, 0.1
    %v1585 = vmul.f32 %v1309, 0.1
    %v1586 = vmul.f32 %v1338, 0.1
    %v1587 = vmul.f32 %v1367, 0.1
    %v1588 = vmul.f32 %v1396, 0.1
    %v1589 = vmul.f32 %v1425, 0.1
    %v1590 = vmul.f32 %v1454, 0.1
    %v1591 = vmul.f32 %v1483, 0.1
    %v1592 = vmul.f32 %v1512, 0.1
    %v1593 = vmul.f32 %v1541, 0.1
    %v1594 = vmul.f32 %v1109, 0.1
    %v1595 = vmul.f32 %v1138, 0.1
    %v1596 = vmul.f32 %v1167, 0.1
    %v1597 = vmul.f32 %v1196, 0.1
    %v1598 = vmul.f32 %v1225, 0.1
    %v1599 = vmul.f32 %v1254, 0.1
    %v1600 = vmul.f32 %v1283, 0.1
    %v1601 = vmul.f32 %v1312, 0.1
    %v1602 = vmul.f32 %v1341, 0.1
    %v1603 = vmul.f32 %v1370, 0.1
    %v1604 = vmul.f32 %v1399, 0.1
    %v1605 = vmul.f32 %v1428, 0.1
    %v1606 = vmul.f32 %v1457, 0.1
    %v1607 = vmul.f32 %v1486, 0.1
    %v1608 = vmul.f32 %v1515, 0.1
    %v1609 = vmul.f32 %v1544, 0.1
    %v1610 = vmax.f32 %v1100, %v1546
    %v1611 = vmax.f32 %v1129, %v1547
    %v1612 = vmax.f32 %v1158, %v1548
    %v1613 = vmax.f32 %v1187, %v1549
    %v1614 = vmax.f32 %v1216, %v1550
    %v1615 = vmax.f32 %v1245, %v1551
    %v1616 = vmax.f32 %v1274, %v1552
    %v1617 = vmax.f32 %v1303, %v1553
    %v1618 = vmax.f32 %v1332, %v1554
    %v1619 = vmax.f32 %v1361, %v1555
    %v1620 = vmax.f32 %v1390, %v1556
    %v1621 = vmax.f32 %v1419, %v1557
    %v1622 = vmax.f32 %v1448, %v1558
    %v1623 = vmax.f32 %v1477, %v1559
    %v1624 = vmax.f32 %v1506, %v1560
    %v1625 = vmax.f32 %v1535, %v1561
    %v1626 = vmax.f32 %v1103, %v1562
    %v1627 = vmax.f32 %v1132, %v1563
    %v1628 = vmax.f32 %v1161, %v1564
    %v1629 = vmax.f32 %v1190, %v1565
    %v1630 = vmax.f32 %v1219, %v1566
    %v1631 = vmax.f32 %v1248, %v1567
    %v1632 = vmax.f32 %v1277, %v1568
    %v1633 = vmax.f32 %v1306, %v1569
    %v1634 = vmax.f32 %v1335, %v1570
    %v1635 = vmax.f32 %v1364, %v1571
    %v1636 = vmax.f32 %v1393, %v1572
    %v1637 = vmax.f32 %v1422, %v1573
    %v1638 = vmax.f32 %v1451, %v1574
    %v1639 = vmax.f32 %v1480, %v1575
    %v1640 = vmax.f32 %v1509, %v1576
    %v1641 = vmax.f32 %v1538, %v1577
    %v1642 = vmax.f32 %v1106, %v1578
    %v1643 = vmax.f32 %v1135, %v1579
    %v1644 = vmax.f32 %v1164, %v1580
    %v1645 = vmax.f32 %v1193, %v1581
    %v1646 = vmax.f32 %v1222, %v1582
    %v1647 = vmax.f32 %v1251, %v1583
    %v1648 = vmax.f32 %v1280, %v1584
    %v1649 = vmax.f32 %v1309, %v1585
    %v1650 = vmax.f32 %v1338, %v1586
    %v1651 = vmax.f32 %v1367, %v1587
    %v1652 = vmax.f32 %v1396, %v1588
    %v1653 = vmax.f32 %v1425, %v1589
    %v1654 = vmax.f32 %v1454, %v1590
    %v1655 = vmax.f32 %v1483, %v1591
    %v1656 = vmax.f32 %v1512, %v1592
    %v1657 = vmax.f32 %v1541, %v1593
    %v1658 = vmax.f32 %v1109, %v1594
    %v1659 = vmax.f32 %v1138, %v1595
    %v1660 = vmax.f32 %v1167, %v1596
    %v1661 = vmax.f32 %v1196, %v1597
    %v1662 = vmax.f32 %v1225, %v1598
    %v1663 = vmax.f32 %v1254, %v1599
    %v1664 = vmax.f32 %v1283, %v1600
    %v1665 = vmax.f32 %v1312, %v1601
    %v1666 = vmax.f32 %v1341, %v1602
    %v1667 = vmax.f32 %v1370, %v1603
    %v1668 = vmax.f32 %v1399, %v1604
    %v1669 = vmax.f32 %v1428, %v1605
    %v1670 = vmax.f32 %v1457, %v1606
    %v1671 = vmax.f32 %v1486, %v1607
    %v1672 = vmax.f32 %v1515, %v1608
    %v1673 = vmax.f32 %v1544, %v1609
    %vm1674 = vcmask 261120
    %v1676 = vsel %vm1674, %v38, 0
    %1678 = vmatpush.msra.mxu0 0.0
    %1679 = vmatpush.msra.mxu0 0.0
    %1680 = vmatpush.msra.mxu0 0.0
    %1681 = vmatpush.msra.mxu0 0.0
    %1682 = vmatpush.msra.mxu0 0.0
    %1683 = vmatpush.msra.mxu0 0.0
    %1684 = vmatpush.msra.mxu0 0.0
    %1685 = vmatpush.msra.mxu0 0.0
    %1686 = vmatpush.msra.mxu0 0.0
    %1687 = vmatpush.msra.mxu0 0.0
    %1688 = vmatpush.msra.mxu0 0.0
    %1689 = vmatpush.msra.mxu0 0.0
    %1690 = vmatpush.msra.mxu0 %v1658
    %1691 = vmatpush.msra.mxu0 %v1642
    %1692 = vmatpush.msra.mxu0 %v1626
    %1693 = vmatpush.msra.mxu0 %v1610
    %1694 = vmatmul.f32.gmra.mxu0 %v1676
    %v1695 = vpop.f32.mrf.mxu0
    %v1696 = vadd.f32 %v69, %v1695
    %1697 = vdwg.mxu0
    %1698 = vmatpush.msra.mxu0 0.0
    %1699 = vmatpush.msra.mxu0 0.0
    %1700 = vmatpush.msra.mxu0 0.0
    %1701 = vmatpush.msra.mxu0 0.0
    %1702 = vmatpush.msra.mxu0 0.0
    %1703 = vmatpush.msra.mxu0 0.0
    %1704 = vmatpush.msra.mxu0 0.0
    %1705 = vmatpush.msra.mxu0 0.0
    %1706 = vmatpush.msra.mxu0 0.0
    %1707 = vmatpush.msra.mxu0 0.0
    %1708 = vmatpush.msra.mxu0 0.0
    %1709 = vmatpush.msra.mxu0 0.0
    %1710 = vmatpush.msra.mxu0 %v1659
    %1711 = vmatpush.msra.mxu0 %v1643
    %1712 = vmatpush.msra.mxu0 %v1627
    %1713 = vmatpush.msra.mxu0 %v1611
    %1714 = vmatmul.f32.gmra.mxu0 %v1676
    %v1715 = vpop.f32.mrf.mxu0
    %v1716 = vadd.f32 %v69, %v1715
    %1717 = vdwg.mxu0
    %1718 = vmatpush.msra.mxu0 0.0
    %1719 = vmatpush.msra.mxu0 0.0
    %1720 = vmatpush.msra.mxu0 0.0
    %1721 = vmatpush.msra.mxu0 0.0
    %1722 = vmatpush.msra.mxu0 0.0
    %1723 = vmatpush.msra.mxu0 0.0
    %1724 = vmatpush.msra.mxu0 0.0
    %1725 = vmatpush.msra.mxu0 0.0
    %1726 = vmatpush.msra.mxu0 0.0
    %1727 = vmatpush.msra.mxu0 0.0
    %1728 = vmatpush.msra.mxu0 0.0
    %1729 = vmatpush.msra.mxu0 0.0
    %1730 = vmatpush.msra.mxu0 %v1660
    %1731 = vmatpush.msra.mxu0 %v1644
    %1732 = vmatpush.msra.mxu0 %v1628
    %1733 = vmatpush.msra.mxu0 %v1612
    %1734 = vmatmul.f32.gmra.mxu0 %v1676
    %v1735 = vpop.f32.mrf.mxu0
    %v1736 = vadd.f32 %v69, %v1735
    %1737 = vdwg.mxu0
    %1738 = vmatpush.msra.mxu0 0.0
    %1739 = vmatpush.msra.mxu0 0.0
    %1740 = vmatpush.msra.mxu0 0.0
    %1741 = vmatpush.msra.mxu0 0.0
    %1742 = vmatpush.msra.mxu0 0.0
    %1743 = vmatpush.msra.mxu0 0.0
    %1744 = vmatpush.msra.mxu0 0.0
    %1745 = vmatpush.msra.mxu0 0.0
    %1746 = vmatpush.msra.mxu0 0.0
    %1747 = vmatpush.msra.mxu0 0.0
    %1748 = vmatpush.msra.mxu0 0.0
    %1749 = vmatpush.msra.mxu0 0.0
    %1750 = vmatpush.msra.mxu0 %v1661
    %1751 = vmatpush.msra.mxu0 %v1645
    %1752 = vmatpush.msra.mxu0 %v1629
    %1753 = vmatpush.msra.mxu0 %v1613
    %1754 = vmatmul.f32.gmra.mxu0 %v1676
    %v1755 = vpop.f32.mrf.mxu0
    %v1756 = vadd.f32 %v69, %v1755
    %1757 = vdwg.mxu0
    %1758 = vmatpush.msra.mxu0 0.0
    %1759 = vmatpush.msra.mxu0 0.0
    %1760 = vmatpush.msra.mxu0 0.0
    %1761 = vmatpush.msra.mxu0 0.0
    %1762 = vmatpush.msra.mxu0 0.0
    %1763 = vmatpush.msra.mxu0 0.0
    %1764 = vmatpush.msra.mxu0 0.0
    %1765 = vmatpush.msra.mxu0 0.0
    %1766 = vmatpush.msra.mxu0 0.0
    %1767 = vmatpush.msra.mxu0 0.0
    %1768 = vmatpush.msra.mxu0 0.0
    %1769 = vmatpush.msra.mxu0 0.0
    %1770 = vmatpush.msra.mxu0 %v1662
    %1771 = vmatpush.msra.mxu0 %v1646
    %1772 = vmatpush.msra.mxu0 %v1630
    %1773 = vmatpush.msra.mxu0 %v1614
    %1774 = vmatmul.f32.gmra.mxu0 %v1676
    %v1775 = vpop.f32.mrf.mxu0
    %v1776 = vadd.f32 %v69, %v1775
    %1777 = vdwg.mxu0
    %1778 = vmatpush.msra.mxu0 0.0
    %1779 = vmatpush.msra.mxu0 0.0
    %1780 = vmatpush.msra.mxu0 0.0
    %1781 = vmatpush.msra.mxu0 0.0
    %1782 = vmatpush.msra.mxu0 0.0
    %1783 = vmatpush.msra.mxu0 0.0
    %1784 = vmatpush.msra.mxu0 0.0
    %1785 = vmatpush.msra.mxu0 0.0
    %1786 = vmatpush.msra.mxu0 0.0
    %1787 = vmatpush.msra.mxu0 0.0
    %1788 = vmatpush.msra.mxu0 0.0
    %1789 = vmatpush.msra.mxu0 0.0
    %1790 = vmatpush.msra.mxu0 %v1663
    %1791 = vmatpush.msra.mxu0 %v1647
    %1792 = vmatpush.msra.mxu0 %v1631
    %1793 = vmatpush.msra.mxu0 %v1615
    %1794 = vmatmul.f32.gmra.mxu0 %v1676
    %v1795 = vpop.f32.mrf.mxu0
    %v1796 = vadd.f32 %v69, %v1795
    %1797 = vdwg.mxu0
    %1798 = vmatpush.msra.mxu0 0.0
    %1799 = vmatpush.msra.mxu0 0.0
    %1800 = vmatpush.msra.mxu0 0.0
    %1801 = vmatpush.msra.mxu0 0.0
    %1802 = vmatpush.msra.mxu0 0.0
    %1803 = vmatpush.msra.mxu0 0.0
    %1804 = vmatpush.msra.mxu0 0.0
    %1805 = vmatpush.msra.mxu0 0.0
    %1806 = vmatpush.msra.mxu0 0.0
    %1807 = vmatpush.msra.mxu0 0.0
    %1808 = vmatpush.msra.mxu0 0.0
    %1809 = vmatpush.msra.mxu0 0.0
    %1810 = vmatpush.msra.mxu0 %v1664
    %1811 = vmatpush.msra.mxu0 %v1648
    %1812 = vmatpush.msra.mxu0 %v1632
    %1813 = vmatpush.msra.mxu0 %v1616
    %1814 = vmatmul.f32.gmra.mxu0 %v1676
    %v1815 = vpop.f32.mrf.mxu0
    %v1816 = vadd.f32 %v69, %v1815
    %1817 = vdwg.mxu0
    %1818 = vmatpush.msra.mxu0 0.0
    %1819 = vmatpush.msra.mxu0 0.0
    %1820 = vmatpush.msra.mxu0 0.0
    %1821 = vmatpush.msra.mxu0 0.0
    %1822 = vmatpush.msra.mxu0 0.0
    %1823 = vmatpush.msra.mxu0 0.0
    %1824 = vmatpush.msra.mxu0 0.0
    %1825 = vmatpush.msra.mxu0 0.0
    %1826 = vmatpush.msra.mxu0 0.0
    %1827 = vmatpush.msra.mxu0 0.0
    %1828 = vmatpush.msra.mxu0 0.0
    %1829 = vmatpush.msra.mxu0 0.0
    %1830 = vmatpush.msra.mxu0 %v1665
    %1831 = vmatpush.msra.mxu0 %v1649
    %1832 = vmatpush.msra.mxu0 %v1633
    %1833 = vmatpush.msra.mxu0 %v1617
    %1834 = vmatmul.f32.gmra.mxu0 %v1676
    %v1835 = vpop.f32.mrf.mxu0
    %v1836 = vadd.f32 %v69, %v1835
    %1837 = vdwg.mxu0
    %1838 = vmatpush.msra.mxu0 0.0
    %1839 = vmatpush.msra.mxu0 0.0
    %1840 = vmatpush.msra.mxu0 0.0
    %1841 = vmatpush.msra.mxu0 0.0
    %1842 = vmatpush.msra.mxu0 0.0
    %1843 = vmatpush.msra.mxu0 0.0
    %1844 = vmatpush.msra.mxu0 0.0
    %1845 = vmatpush.msra.mxu0 0.0
    %1846 = vmatpush.msra.mxu0 0.0
    %1847 = vmatpush.msra.mxu0 0.0
    %1848 = vmatpush.msra.mxu0 0.0
    %1849 = vmatpush.msra.mxu0 0.0
    %1850 = vmatpush.msra.mxu0 %v1666
    %1851 = vmatpush.msra.mxu0 %v1650
    %1852 = vmatpush.msra.mxu0 %v1634
    %1853 = vmatpush.msra.mxu0 %v1618
    %1854 = vmatmul.f32.gmra.mxu0 %v1676
    %v1855 = vpop.f32.mrf.mxu0
    %v1856 = vadd.f32 %v69, %v1855
    %1857 = vdwg.mxu0
    %1858 = vmatpush.msra.mxu0 0.0
    %1859 = vmatpush.msra.mxu0 0.0
    %1860 = vmatpush.msra.mxu0 0.0
    %1861 = vmatpush.msra.mxu0 0.0
    %1862 = vmatpush.msra.mxu0 0.0
    %1863 = vmatpush.msra.mxu0 0.0
    %1864 = vmatpush.msra.mxu0 0.0
    %1865 = vmatpush.msra.mxu0 0.0
    %1866 = vmatpush.msra.mxu0 0.0
    %1867 = vmatpush.msra.mxu0 0.0
    %1868 = vmatpush.msra.mxu0 0.0
    %1869 = vmatpush.msra.mxu0 0.0
    %1870 = vmatpush.msra.mxu0 %v1667
    %1871 = vmatpush.msra.mxu0 %v1651
    %1872 = vmatpush.msra.mxu0 %v1635
    %1873 = vmatpush.msra.mxu0 %v1619
    %1874 = vmatmul.f32.gmra.mxu0 %v1676
    %v1875 = vpop.f32.mrf.mxu0
    %v1876 = vadd.f32 %v69, %v1875
    %1877 = vdwg.mxu0
    %1878 = vmatpush.msra.mxu0 0.0
    %1879 = vmatpush.msra.mxu0 0.0
    %1880 = vmatpush.msra.mxu0 0.0
    %1881 = vmatpush.msra.mxu0 0.0
    %1882 = vmatpush.msra.mxu0 0.0
    %1883 = vmatpush.msra.mxu0 0.0
    %1884 = vmatpush.msra.mxu0 0.0
    %1885 = vmatpush.msra.mxu0 0.0
    %1886 = vmatpush.msra.mxu0 0.0
    %1887 = vmatpush.msra.mxu0 0.0
    %1888 = vmatpush.msra.mxu0 0.0
    %1889 = vmatpush.msra.mxu0 0.0
    %1890 = vmatpush.msra.mxu0 %v1668
    %1891 = vmatpush.msra.mxu0 %v1652
    %1892 = vmatpush.msra.mxu0 %v1636
    %1893 = vmatpush.msra.mxu0 %v1620
    %1894 = vmatmul.f32.gmra.mxu0 %v1676
    %v1895 = vpop.f32.mrf.mxu0
    %v1896 = vadd.f32 %v69, %v1895
    %1897 = vdwg.mxu0
    %1898 = vmatpush.msra.mxu0 0.0
    %1899 = vmatpush.msra.mxu0 0.0
    %1900 = vmatpush.msra.mxu0 0.0
    %1901 = vmatpush.msra.mxu0 0.0
    %1902 = vmatpush.msra.mxu0 0.0
    %1903 = vmatpush.msra.mxu0 0.0
    %1904 = vmatpush.msra.mxu0 0.0
    %1905 = vmatpush.msra.mxu0 0.0
    %1906 = vmatpush.msra.mxu0 0.0
    %1907 = vmatpush.msra.mxu0 0.0
    %1908 = vmatpush.msra.mxu0 0.0
    %1909 = vmatpush.msra.mxu0 0.0
    %1910 = vmatpush.msra.mxu0 %v1669
    %1911 = vmatpush.msra.mxu0 %v1653
    %1912 = vmatpush.msra.mxu0 %v1637
    %1913 = vmatpush.msra.mxu0 %v1621
    %1914 = vmatmul.f32.gmra.mxu0 %v1676
    %v1915 = vpop.f32.mrf.mxu0
    %v1916 = vadd.f32 %v69, %v1915
    %1917 = vdwg.mxu0
    %1918 = vmatpush.msra.mxu0 0.0
    %1919 = vmatpush.msra.mxu0 0.0
    %1920 = vmatpush.msra.mxu0 0.0
    %1921 = vmatpush.msra.mxu0 0.0
    %1922 = vmatpush.msra.mxu0 0.0
    %1923 = vmatpush.msra.mxu0 0.0
    %1924 = vmatpush.msra.mxu0 0.0
    %1925 = vmatpush.msra.mxu0 0.0
    %1926 = vmatpush.msra.mxu0 0.0
    %1927 = vmatpush.msra.mxu0 0.0
    %1928 = vmatpush.msra.mxu0 0.0
    %1929 = vmatpush.msra.mxu0 0.0
    %1930 = vmatpush.msra.mxu0 %v1670
    %1931 = vmatpush.msra.mxu0 %v1654
    %1932 = vmatpush.msra.mxu0 %v1638
    %1933 = vmatpush.msra.mxu0 %v1622
    %1934 = vmatmul.f32.gmra.mxu0 %v1676
    %v1935 = vpop.f32.mrf.mxu0
    %v1936 = vadd.f32 %v69, %v1935
    %1937 = vdwg.mxu0
    %1938 = vmatpush.msra.mxu0 0.0
    %1939 = vmatpush.msra.mxu0 0.0
    %1940 = vmatpush.msra.mxu0 0.0
    %1941 = vmatpush.msra.mxu0 0.0
    %1942 = vmatpush.msra.mxu0 0.0
    %1943 = vmatpush.msra.mxu0 0.0
    %1944 = vmatpush.msra.mxu0 0.0
    %1945 = vmatpush.msra.mxu0 0.0
    %1946 = vmatpush.msra.mxu0 0.0
    %1947 = vmatpush.msra.mxu0 0.0
    %1948 = vmatpush.msra.mxu0 0.0
    %1949 = vmatpush.msra.mxu0 0.0
    %1950 = vmatpush.msra.mxu0 %v1671
    %1951 = vmatpush.msra.mxu0 %v1655
    %1952 = vmatpush.msra.mxu0 %v1639
    %1953 = vmatpush.msra.mxu0 %v1623
    %1954 = vmatmul.f32.gmra.mxu0 %v1676
    %v1955 = vpop.f32.mrf.mxu0
    %v1956 = vadd.f32 %v69, %v1955
    %1957 = vdwg.mxu0
    %1958 = vmatpush.msra.mxu0 0.0
    %1959 = vmatpush.msra.mxu0 0.0
    %1960 = vmatpush.msra.mxu0 0.0
    %1961 = vmatpush.msra.mxu0 0.0
    %1962 = vmatpush.msra.mxu0 0.0
    %1963 = vmatpush.msra.mxu0 0.0
    %1964 = vmatpush.msra.mxu0 0.0
    %1965 = vmatpush.msra.mxu0 0.0
    %1966 = vmatpush.msra.mxu0 0.0
    %1967 = vmatpush.msra.mxu0 0.0
    %1968 = vmatpush.msra.mxu0 0.0
    %1969 = vmatpush.msra.mxu0 0.0
    %1970 = vmatpush.msra.mxu0 %v1672
    %1971 = vmatpush.msra.mxu0 %v1656
    %1972 = vmatpush.msra.mxu0 %v1640
    %1973 = vmatpush.msra.mxu0 %v1624
    %1974 = vmatmul.f32.gmra.mxu0 %v1676
    %v1975 = vpop.f32.mrf.mxu0
    %v1976 = vadd.f32 %v69, %v1975
    %1977 = vdwg.mxu0
    %1978 = vmatpush.msra.mxu0 0.0
    %1979 = vmatpush.msra.mxu0 0.0
    %1980 = vmatpush.msra.mxu0 0.0
    %1981 = vmatpush.msra.mxu0 0.0
    %1982 = vmatpush.msra.mxu0 0.0
    %1983 = vmatpush.msra.mxu0 0.0
    %1984 = vmatpush.msra.mxu0 0.0
    %1985 = vmatpush.msra.mxu0 0.0
    %1986 = vmatpush.msra.mxu0 0.0
    %1987 = vmatpush.msra.mxu0 0.0
    %1988 = vmatpush.msra.mxu0 0.0
    %1989 = vmatpush.msra.mxu0 0.0
    %1990 = vmatpush.msra.mxu0 %v1673
    %1991 = vmatpush.msra.mxu0 %v1657
    %1992 = vmatpush.msra.mxu0 %v1641
    %1993 = vmatpush.msra.mxu0 %v1625
    %1994 = vmatmul.f32.gmra.mxu0 %v1676
    %v1995 = vpop.f32.mrf.mxu0
    %v1996 = vadd.f32 %v69, %v1995
    %1997 = vdwg.mxu0
    %v1998 = vmax.f32 %v1696, 0.0
    %v1999 = vmax.f32 %v1716, 0.0
    %v2000 = vmax.f32 %v1736, 0.0
    %v2001 = vmax.f32 %v1756, 0.0
    %v2002 = vmax.f32 %v1776, 0.0
    %v2003 = vmax.f32 %v1796, 0.0
    %v2004 = vmax.f32 %v1816, 0.0
    %v2005 = vmax.f32 %v1836, 0.0
    %v2006 = vmax.f32 %v1856, 0.0
    %v2007 = vmax.f32 %v1876, 0.0
    %v2008 = vmax.f32 %v1896, 0.0
    %v2009 = vmax.f32 %v1916, 0.0
    %v2010 = vmax.f32 %v1936, 0.0
    %v2011 = vmax.f32 %v1956, 0.0
    %v2012 = vmax.f32 %v1976, 0.0
    %v2013 = vmax.f32 %v1996, 0.0
    %v2014 = vand.u32 2147483647, %v1696
    %v2015 = vand.u32 2147483647, %v1716
    %v2016 = vand.u32 2147483647, %v1736
    %v2017 = vand.u32 2147483647, %v1756
    %v2018 = vand.u32 2147483647, %v1776
    %v2019 = vand.u32 2147483647, %v1796
    %v2020 = vand.u32 2147483647, %v1816
    %v2021 = vand.u32 2147483647, %v1836
    %v2022 = vand.u32 2147483647, %v1856
    %v2023 = vand.u32 2147483647, %v1876
    %v2024 = vand.u32 2147483647, %v1896
    %v2025 = vand.u32 2147483647, %v1916
    %v2026 = vand.u32 2147483647, %v1936
    %v2027 = vand.u32 2147483647, %v1956
    %v2028 = vand.u32 2147483647, %v1976
    %v2029 = vand.u32 2147483647, %v1996
    %v2030 = vsub.f32 0.0, %v2014
    %v2031 = vsub.f32 0.0, %v2015
    %v2032 = vsub.f32 0.0, %v2016
    %v2033 = vsub.f32 0.0, %v2017
    %v2034 = vsub.f32 0.0, %v2018
    %v2035 = vsub.f32 0.0, %v2019
    %v2036 = vsub.f32 0.0, %v2020
    %v2037 = vsub.f32 0.0, %v2021
    %v2038 = vsub.f32 0.0, %v2022
    %v2039 = vsub.f32 0.0, %v2023
    %v2040 = vsub.f32 0.0, %v2024
    %v2041 = vsub.f32 0.0, %v2025
    %v2042 = vsub.f32 0.0, %v2026
    %v2043 = vsub.f32 0.0, %v2027
    %v2044 = vsub.f32 0.0, %v2028
    %v2045 = vsub.f32 0.0, %v2029
    %v2046 = vmul.f32 %v2030, 1.442695
    %v2047 = vpow.pop %v2046
    %v2048 = vmul.f32 %v2031, 1.442695
    %v2049 = vpow.pop %v2048
    %v2050 = vmul.f32 %v2032, 1.442695
    %v2051 = vpow.pop %v2050
    %v2052 = vmul.f32 %v2033, 1.442695
    %v2053 = vpow.pop %v2052
    %v2054 = vmul.f32 %v2034, 1.442695
    %v2055 = vpow.pop %v2054
    %v2056 = vmul.f32 %v2035, 1.442695
    %v2057 = vpow.pop %v2056
    %v2058 = vmul.f32 %v2036, 1.442695
    %v2059 = vpow.pop %v2058
    %v2060 = vmul.f32 %v2037, 1.442695
    %v2061 = vpow.pop %v2060
    %v2062 = vmul.f32 %v2038, 1.442695
    %v2063 = vpow.pop %v2062
    %v2064 = vmul.f32 %v2039, 1.442695
    %v2065 = vpow.pop %v2064
    %v2066 = vmul.f32 %v2040, 1.442695
    %v2067 = vpow.pop %v2066
    %v2068 = vmul.f32 %v2041, 1.442695
    %v2069 = vpow.pop %v2068
    %v2070 = vmul.f32 %v2042, 1.442695
    %v2071 = vpow.pop %v2070
    %v2072 = vmul.f32 %v2043, 1.442695
    %v2073 = vpow.pop %v2072
    %v2074 = vmul.f32 %v2044, 1.442695
    %v2075 = vpow.pop %v2074
    %v2076 = vmul.f32 %v2045, 1.442695
    %v2077 = vpow.pop %v2076
    %v2078 = vadd.f32 %v2047, 1.0
    %v2079 = vadd.f32 %v2049, 1.0
    %v2080 = vadd.f32 %v2051, 1.0
    %v2081 = vadd.f32 %v2053, 1.0
    %v2082 = vadd.f32 %v2055, 1.0
    %v2083 = vadd.f32 %v2057, 1.0
    %v2084 = vadd.f32 %v2059, 1.0
    %v2085 = vadd.f32 %v2061, 1.0
    %v2086 = vadd.f32 %v2063, 1.0
    %v2087 = vadd.f32 %v2065, 1.0
    %v2088 = vadd.f32 %v2067, 1.0
    %v2089 = vadd.f32 %v2069, 1.0
    %v2090 = vadd.f32 %v2071, 1.0
    %v2091 = vadd.f32 %v2073, 1.0
    %v2092 = vadd.f32 %v2075, 1.0
    %v2093 = vadd.f32 %v2077, 1.0
    %v2094 = vlog2.pop %v2078
    %v2095 = vmul.f32 %v2094, 0.6931472
    %v2096 = vlog2.pop %v2079
    %v2097 = vmul.f32 %v2096, 0.6931472
    %v2098 = vlog2.pop %v2080
    %v2099 = vmul.f32 %v2098, 0.6931472
    %v2100 = vlog2.pop %v2081
    %v2101 = vmul.f32 %v2100, 0.6931472
    %v2102 = vlog2.pop %v2082
    %v2103 = vmul.f32 %v2102, 0.6931472
    %v2104 = vlog2.pop %v2083
    %v2105 = vmul.f32 %v2104, 0.6931472
    %v2106 = vlog2.pop %v2084
    %v2107 = vmul.f32 %v2106, 0.6931472
    %v2108 = vlog2.pop %v2085
    %v2109 = vmul.f32 %v2108, 0.6931472
    %v2110 = vlog2.pop %v2086
    %v2111 = vmul.f32 %v2110, 0.6931472
    %v2112 = vlog2.pop %v2087
    %v2113 = vmul.f32 %v2112, 0.6931472
    %v2114 = vlog2.pop %v2088
    %v2115 = vmul.f32 %v2114, 0.6931472
    %v2116 = vlog2.pop %v2089
    %v2117 = vmul.f32 %v2116, 0.6931472
    %v2118 = vlog2.pop %v2090
    %v2119 = vmul.f32 %v2118, 0.6931472
    %v2120 = vlog2.pop %v2091
    %v2121 = vmul.f32 %v2120, 0.6931472
    %v2122 = vlog2.pop %v2092
    %v2123 = vmul.f32 %v2122, 0.6931472
    %v2124 = vlog2.pop %v2093
    %v2125 = vmul.f32 %v2124, 0.6931472
    %v2126 = vadd.f32 %v1998, %v2095
    %v2127 = vadd.f32 %v1999, %v2097
    %v2128 = vadd.f32 %v2000, %v2099
    %v2129 = vadd.f32 %v2001, %v2101
    %v2130 = vadd.f32 %v2002, %v2103
    %v2131 = vadd.f32 %v2003, %v2105
    %v2132 = vadd.f32 %v2004, %v2107
    %v2133 = vadd.f32 %v2005, %v2109
    %v2134 = vadd.f32 %v2006, %v2111
    %v2135 = vadd.f32 %v2007, %v2113
    %v2136 = vadd.f32 %v2008, %v2115
    %v2137 = vadd.f32 %v2009, %v2117
    %v2138 = vadd.f32 %v2010, %v2119
    %v2139 = vadd.f32 %v2011, %v2121
    %v2140 = vadd.f32 %v2012, %v2123
    %v2141 = vadd.f32 %v2013, %v2125
    %v2142 = vmax.f32 %v2126, 0.1
    %v2143 = vmax.f32 %v2127, 0.1
    %v2144 = vmax.f32 %v2128, 0.1
    %v2145 = vmax.f32 %v2129, 0.1
    %v2146 = vmax.f32 %v2130, 0.1
    %v2147 = vmax.f32 %v2131, 0.1
    %v2148 = vmax.f32 %v2132, 0.1
    %v2149 = vmax.f32 %v2133, 0.1
    %v2150 = vmax.f32 %v2134, 0.1
    %v2151 = vmax.f32 %v2135, 0.1
    %v2152 = vmax.f32 %v2136, 0.1
    %v2153 = vmax.f32 %v2137, 0.1
    %v2154 = vmax.f32 %v2138, 0.1
    %v2155 = vmax.f32 %v2139, 0.1
    %v2156 = vmax.f32 %v2140, 0.1
    %v2157 = vmax.f32 %v2141, 0.1
    %v2174 = vrot.slane %v2143, 7
    %v2175 = vrot.slane %v2144, 6
    %v2176 = vrot.slane %v2145, 5
    %v2177 = vrot.slane %v2146, 4
    %v2178 = vrot.slane %v2147, 3
    %v2179 = vrot.slane %v2148, 2
    %v2180 = vrot.slane %v2149, 1
    %v2181 = vrot.slane %v2151, 7
    %v2182 = vrot.slane %v2152, 6
    %v2183 = vrot.slane %v2153, 5
    %v2184 = vrot.slane %v2154, 4
    %v2185 = vrot.slane %v2155, 3
    %v2186 = vrot.slane %v2156, 2
    %v2187 = vrot.slane %v2157, 1
    %vm2188 = vcmask 1040384
    %v2189 = vsel %vm2188, %v2142, %v2174
    %vm2190 = vcmask 1042434
    %v2191 = vsel %vm2190, %v2175, %v2176
    %v2192 = vsel %vm124, %v2189, %v2191
    %vm2193 = vcmask 1044484
    %v2194 = vsel %vm2193, %v2177, %v2178
    %vm2195 = vcmask 1046534
    %v2196 = vsel %vm2195, %v2179, %v2180
    %vm2197 = vcmask 1045508
    %v2198 = vsel %vm2197, %v2194, %v2196
    %vm2199 = vcmask 1043456
    %v2200 = vsel %vm2199, %v2192, %v2198
    %v2201 = vsel %vm2188, %v2150, %v2181
    %v2202 = vsel %vm2190, %v2182, %v2183
    %v2203 = vsel %vm124, %v2201, %v2202
    %v2204 = vsel %vm2193, %v2184, %v2185
    %v2205 = vsel %vm2195, %v2186, %v2187
    %v2206 = vsel %vm2197, %v2204, %v2205
    %v2207 = vsel %vm2199, %v2203, %v2206
    %2210 = vst [vmem:[#allocation3] sm:$0xff] %v2200
    %2211 = vst [vmem:[#allocation3 + $0x8] sm:$0xff] %v2207
    // Predicated region
    $region26: #{tpu_custom_call.1} parent=1 // pred_check
      _
    $region27: #{tpu_custom_call.1} parent=1 // pred_check_branch
      %2213 = sbr.rel (0) target = $region29
    $region28: #{tpu_custom_call.1} parent=1 // pred_region
      %2215 = vsyncadd [#allocation4], 0
      %s2217 = sshll.u32 [#allocation3], 4
      %s2218 = int_to_ptr.vmem [resolvable:$true] %s2217
      %s2219 = sshll.u32 %s6, 4
      %s2220 = int_to_ptr.hbm [resolvable:$true] %s2219
      %2222 = dma.vmem_to_hbm [thread:$0]  %s2218, 256, %s2220, [#allocation4]
    $region29: #{tpu_custom_call.1} parent=1 // pred_fallthru
      _
    // Predicated region
    $region30: #{tpu_custom_call.1} parent=1 // pred_check
      _
    $region31: #{tpu_custom_call.1} parent=1 // pred_check_branch
      %2224 = sbr.rel (0) target = $region33
    $region32: #{tpu_custom_call.1} parent=1 // pred_region
      %2226 = dma.done [#allocation4], 256
    $region33: #{tpu_custom_call.1} parent=1 // pred_fallthru
      _
    %2227 = vsyncpa [#allocation4], 1

</llo_original>
